<compile_context>
chip_gen: v5e
topology: v5e:2x2
jax: 0.10.0
libtpu: 0.0.40
codegen_flags: <defaults>
</compile_context>

<pallas_src>
import math
import functools

import jax
import jax.numpy as jnp
from jax import lax
from jax.experimental import pallas as pl
from jax.experimental.pallas import tpu as pltpu

EPS = 1e-5          # PyTorch nn.LayerNorm default eps
_NEG_BIG = -1e30    # finite "masked" value (avoids -inf - -inf NaN pitfalls)


# ------------------------------- small helpers -------------------------------

def _round_up(n, m):
    return ((n + m - 1) // m) * m


@functools.lru_cache(maxsize=None)
def _vmem_limit_bytes():
    """~75% of physical VMEM, capped at 100 MiB (v5e/v6e ~96 MiB, v7x 48 MiB)."""
    try:
        cap = int(pltpu.get_tpu_info().vmem_capacity_bytes)
        if cap < (16 << 20):
            cap = 64 << 20
    except Exception:
        cap = 64 << 20
    return min((cap * 3) // 4, 100 << 20)


def _pick_bb(B, T, target_rows=256):
    """Batch rows per grid step so Bb*T ~ target_rows (fills MXU sublanes)."""
    bb = max(1, min(B, -(-target_rows // T)))
    while B % bb:
        bb -= 1
    return bb


def _layernorm_padded(x, w, b, n_real):
    """LayerNorm over the first n_real lanes of a zero-padded x.

    Padded lanes of x are exactly zero, so sum(x)/n_real and sum(x^2)/n_real
    are the real-lane statistics; padded gamma/beta are zero so the output's
    padded lanes stay zero.
    """
    inv_n = 1.0 / float(n_real)
    mu = jnp.sum(x, axis=-1, keepdims=True) * inv_n
    ex2 = jnp.sum(x * x, axis=-1, keepdims=True) * inv_n
    var = ex2 - mu * mu
    return (x - mu) * lax.rsqrt(var + EPS) * w + b


def _gelu_exact(x):
    # nn.GELU() default: exact, erf-based.
    return 0.5 * x * (1.0 + lax.erf(x * (1.0 / math.sqrt(2.0))))


# ------------------------------ Pallas kernels -------------------------------

def gpt_blocks_kernel(E, x_ref, vecs_ref, wbig_ref, w2_ref, lnf_ref, out_ref):
    """All transformer Blocks fused; grid = (B//Bb, L), L is 'arbitrary'.

    out_ref (block index depends only on the batch axis) stays VMEM-resident
    across the L axis and doubles as the residual-stream accumulator.  At
    l == L-1 the final LayerNorm is applied in place (head kernel then only
    does the vocab matmul).
    """
    l = pl.program_id(1)
    L = pl.num_programs(1)
    Bb, T, Ep = out_ref.shape
    Fp = w2_ref.shape[1]
    Hp = (wbig_ref.shape[2] - Ep - Fp) // 2
    R = Bb * T

    @pl.when(l == 0)
    def _init():
        out_ref[...] = x_ref[...]          # embedded tokens (padded lanes zero)

    x = out_ref[...].reshape(R, Ep)        # (rows, Ep) f32 residual

    # Packed per-layer vectors (one DMA): rows are
    # [ln1w, ln1b, bq*scale, bk, bv_tiled, ln2w, ln2b, b1, b2].
    ln1w = vecs_ref[0, 0:1, 0:Ep]
    ln1b = vecs_ref[0, 1:2, 0:Ep]
    bq   = vecs_ref[0, 2:3, 0:Hp]
    bk   = vecs_ref[0, 3:4, 0:Hp]
    bv   = vecs_ref[0, 4:5, 0:Ep]
    ln2w = vecs_ref[0, 5:6, 0:Ep]
    ln2b = vecs_ref[0, 6:7, 0:Ep]
    b1   = vecs_ref[0, 7:8, 0:Fp]
    b2   = vecs_ref[0, 8:9, 0:Ep]

    # Fused weight slab: 128-aligned lane segments [Wq*scale | Wk | Wv_tiled | W1].
    wq = wbig_ref[0, :, 0:Hp]
    wk = wbig_ref[0, :, Hp:2 * Hp]
    wv = wbig_ref[0, :, 2 * Hp:2 * Hp + Ep]
    w1 = wbig_ref[0, :, 2 * Hp + Ep:]

    # ---- attention branch: x + attn(LN1(x)) ----
    xn = _layernorm_padded(x, ln1w, ln1b, E).astype(jnp.bfloat16)
    q = jnp.dot(xn, wq, preferred_element_type=jnp.float32) + bq   # scale folded in
    k = jnp.dot(xn, wk, preferred_element_type=jnp.float32) + bk
    v = jnp.dot(xn, wv, preferred_element_type=jnp.float32) + bv   # already head-tiled

    q = q.reshape(Bb, T, Hp).astype(jnp.bfloat16)
    k = k.reshape(Bb, T, Hp).astype(jnp.bfloat16)
    v = v.reshape(Bb, T, Ep).astype(jnp.bfloat16)

    s = jnp.einsum('bqh,bkh->bqk', q, k,
                   preferred_element_type=jnp.float32)             # (Bb, T, T)
    row = lax.broadcasted_iota(jnp.int32, (T, T), 0)
    col = lax.broadcasted_iota(jnp.int32, (T, T), 1)
    s = jnp.where((col <= row)[None, :, :], s, _NEG_BIG)           # causal mask, inline
    s = s - jnp.max(s, axis=-1, keepdims=True)
    p = jnp.exp(s)
    p = p * pl.reciprocal(jnp.sum(p, axis=-1, keepdims=True), approx=True)
    att = jnp.einsum('bqk,bkd->bqd', p.astype(jnp.bfloat16), v,
                     preferred_element_type=jnp.float32)           # (Bb, T, Ep)
    x = x + att.reshape(R, Ep)

    # ---- feed-forward branch: x + FFN(LN2(x)) ----
    xn2 = _layernorm_padded(x, ln2w, ln2b, E).astype(jnp.bfloat16)
    h = jnp.dot(xn2, w1, preferred_element_type=jnp.float32) + b1
    h = _gelu_exact(h).astype(jnp.bfloat16)
    y = jnp.dot(h, w2_ref[0], preferred_element_type=jnp.float32) + b2
    x = x + y

    @pl.when(l < L - 1)
    def _store():
        out_ref[...] = x.reshape(Bb, T, Ep)

    @pl.when(l == L - 1)
    def _final():
        # Fused final LayerNorm (hoisted out of the per-vocab-tile head loop).
        lnfw = lnf_ref[0:1, :]
        lnfb = lnf_ref[1:2, :]
        out_ref[...] = _layernorm_padded(x, lnfw, lnfb, E).reshape(Bb, T, Ep)


def head_kernel(x_ref, w_ref, o_ref):
    """Vocab projection (bias=False) on one (tm, tv) tile; input is already LN'd."""
    o_ref[...] = jnp.dot(x_ref[...].astype(jnp.bfloat16), w_ref[...],
                         preferred_element_type=jnp.float32)


# ------------------------------ pallas_call glue ------------------------------

def run_blocks(x, vecs, wbig, w2, lnf, embed_size):
    """Run all L transformer blocks (+ final LayerNorm) in one fused pallas_call."""
    B, T, Ep = x.shape
    L = wbig.shape[0]
    Bb = _pick_bb(B, T)

    xmap = lambda b, l: (b, 0, 0)   # activation blocks follow the batch axis
    wmap = lambda b, l: (l, 0, 0)   # weight blocks follow the layer axis

    return pl.pallas_call(
        functools.partial(gpt_blocks_kernel, embed_size),
        out_shape=jax.ShapeDtypeStruct((B, T, Ep), jnp.float32),
        grid=(B // Bb, L),
        in_specs=[
            pl.BlockSpec((Bb, T, Ep), xmap),                    # embedded tokens
            pl.BlockSpec((1,) + vecs.shape[1:], wmap),          # packed per-layer vectors
            pl.BlockSpec((1,) + wbig.shape[1:], wmap),          # fused Wq|Wk|Wv_tiled|W1
            pl.BlockSpec((1,) + w2.shape[1:], wmap),            # W2
            pl.BlockSpec(lnf.shape, lambda b, l: (0, 0)),       # final LN gamma/beta
        ],
        out_specs=pl.BlockSpec((Bb, T, Ep), xmap),
        compiler_params=pltpu.CompilerParams(
            dimension_semantics=("parallel", "arbitrary"),
            vmem_limit_bytes=_vmem_limit_bytes()),
    )(x, vecs, wbig, w2, lnf)


def run_head(xn, w_vocab, vocab_size):
    """Vocab projection over the lnf-normalized residual, tiled over (rows, vocab)."""
    B, T, Ep = xn.shape
    Vp = w_vocab.shape[1]
    M = B * T
    x2 = xn.reshape(M, Ep)

    tm = min(256, _round_up(M, 8))
    Mp = _round_up(M, tm)
    if Mp != M:
        x2 = jnp.pad(x2, ((0, Mp - M), (0, 0)))
    tv = next(c for c in (512, 256, 128) if Vp % c == 0)   # Vp is a multiple of 128

    out = pl.pallas_call(
        head_kernel,
        out_shape=jax.ShapeDtypeStruct((Mp, Vp), jnp.float32),
        grid=(Mp // tm, Vp // tv),
        in_specs=[pl.BlockSpec((tm, Ep), lambda i, j: (i, 0)),
                  pl.BlockSpec((Ep, tv), lambda i, j: (0, j))],
        out_specs=pl.BlockSpec((tm, tv), lambda i, j: (i, j)),
        compiler_params=pltpu.CompilerParams(
            dimension_semantics=("parallel", "parallel"),
            vmem_limit_bytes=_vmem_limit_bytes()),
    )(x2, w_vocab)
    return out[:M, :vocab_size].reshape(B, T, vocab_size)


# -------------------------------- model params --------------------------------

def init_params(key, num_layers, num_embeddings, time_step, embed_size,
                head_size, num_heads):
    """Build parameters in natural (PyTorch-like) shapes, then pack/pad them
    into the TPU-friendly lane-dense layout used by the fused kernel."""
    V, T, E, H, L = num_embeddings, time_step, embed_size, head_size, num_layers
    assert E == H * num_heads
    F = 4 * E
    Ep, Hp, Fp, Vp = (_round_up(d, 128) for d in (E, H, F, V))
    P = max(Ep, Hp, Fp)
    std = 0.02
    k = jax.random.split(key, 8)

    def nrm(kk, shape):
        return std * jax.random.normal(kk, shape, jnp.float32)

    # --- natural weights (already transposed for x @ W) ---
    tok = nrm(k[0], (V, E))
    pos = nrm(k[1], (T, E))
    wq, wk, wv = nrm(k[2], (L, E, H)), nrm(k[3], (L, E, H)), nrm(k[4], (L, E, H))
    w1, w2 = nrm(k[5], (L, E, F)), nrm(k[6], (L, F, E))
    w_vocab = nrm(k[7], (E, V))
    zeros = functools.partial(jnp.zeros, dtype=jnp.float32)
    ones = functools.partial(jnp.ones, dtype=jnp.float32)
    ln1w, ln1b = ones((L, E)), zeros((L, E))
    ln2w, ln2b = ones((L, E)), zeros((L, E))
    lnfw, lnfb = ones((E,)), zeros((E,))
    bq, bk, bv = zeros((L, H)), zeros((L, H)), zeros((L, H))
    b1, b2 = zeros((L, F)), zeros((L, E))

    # --- TPU-friendly packed / padded layout ---
    scale = float(E) ** -0.5                     # C**-0.5, C = embed_size (reference quirk)
    wv_t = jnp.tile(wv, (1, 1, num_heads))       # heads identical -> concat == tile
    bv_t = jnp.tile(bv, (1, num_heads))

    def pad3(a, r, c):
        return jnp.pad(a, ((0, 0), (0, r - a.shape[1]), (0, c - a.shape[2])))

    wbig = jnp.concatenate([
        pad3(wq * scale, Ep, Hp), pad3(wk, Ep, Hp),
        pad3(wv_t, Ep, Ep), pad3(w1, Ep, Fp)], axis=-1).astype(jnp.bfloat16)
    w2p = pad3(w2, Fp, Ep).astype(jnp.bfloat16)

    def vrow(v):                                  # (L, n) -> (L, 1, P)
        return jnp.pad(v, ((0, 0), (0, P - v.shape[-1])))[:, None, :]

    vecs = jnp.concatenate([
        vrow(ln1w), vrow(ln1b), vrow(bq * scale), vrow(bk), vrow(bv_t),
        vrow(ln2w), vrow(ln2b), vrow(b1), vrow(b2)], axis=1)      # (L, 9, P)

    lnf = jnp.stack([jnp.pad(lnfw, (0, Ep - E)),
                     jnp.pad(lnfb, (0, Ep - E))])                 # (2, Ep)

    return {
        'tok_emb': jnp.pad(tok, ((0, 0), (0, Ep - E))),
        'pos_emb': jnp.pad(pos, ((0, 0), (0, Ep - E))),
        'vecs': vecs,
        'wbig': wbig,
        'w2': w2p,
        'lnf': lnf,
        'w_vocab': jnp.pad(w_vocab, ((0, Ep - E), (0, Vp - V))).astype(jnp.bfloat16),
    }


@functools.partial(jax.jit, static_argnums=(2, 3))
def gpt_forward(params, tokens, embed_size, vocab_size):
    """Returns (logits, loss=None); matches GPTModel.forward with y=None."""
    B, T = tokens.shape
    # glue: embedding gathers + positional add (dropout = identity in eval mode)
    x = params['tok_emb'][tokens] + params['pos_emb'][jnp.arange(T)]
    xn = run_blocks(x, params['vecs'], params['wbig'], params['w2'],
                    params['lnf'], embed_size)
    logits = run_head(xn, params['w_vocab'], vocab_size)
    # TODO(synk): cross-entropy loss path (y is not None) not implemented; forward is called with y=None.
    return logits, None


# ------------------------------------ main ------------------------------------

if __name__ == "__main__":
    # small config: embed_size = head_size * num_heads must hold
    num_layers = 2
    num_embeddings = 64   # vocab size
    time_step = 8
    embed_size = 32
    num_heads = 4
    head_size = 8
    B, T = 2, 8

    key = jax.random.PRNGKey(0)
    pkey, tkey = jax.random.split(key)
    params = init_params(pkey, num_layers, num_embeddings, time_step,
                         embed_size, head_size, num_heads)
    tokens = jax.random.randint(tkey, (B, T), 0, num_embeddings, dtype=jnp.int32)

    logits, loss = gpt_forward(params, tokens, embed_size, num_embeddings)
    logits = jax.block_until_ready(logits)
    assert logits.shape == (B, T, num_embeddings)
    assert loss is None
    assert bool(jnp.all(jnp.isfinite(logits)))
    print("KERNEL_OK")
</pallas_src>

<mosaic_0001>
module attributes {stable_mosaic.version = 11 : i64} {
  func.func @head_kernel(%arg0: i32, %arg1: i32, %arg2: memref<16x128xf32, #tpu.memory_space<vmem>>, %arg3: memref<128x128xbf16, #tpu.memory_space<vmem>>, %arg4: memref<16x128xf32, #tpu.memory_space<vmem>>) attributes {dimension_semantics = [#tpu.dimension_semantics<parallel>, #tpu.dimension_semantics<parallel>], iteration_bounds = array<i64: 1, 1>, scalar_prefetch = 0 : i64, scratch_operands = 0 : i64, tpu.core_type = #tpu.core_type<tc>, window_params = [{transform_indices = @transform_0, window_bounds = array<i64: 16, 128>}, {transform_indices = @transform_1, window_bounds = array<i64: 128, 128>}, {transform_indices = @transform_2, window_bounds = array<i64: 16, 128>}]} {
    %c0 = arith.constant 0 : index
    %c0_0 = arith.constant 0 : index
    %0 = vector.load %arg2[%c0, %c0_0] : memref<16x128xf32, #tpu.memory_space<vmem>>, vector<16x128xf32>
    %1 = arith.truncf %0 : vector<16x128xf32> to vector<16x128xbf16>
    %c0_1 = arith.constant 0 : index
    %c0_2 = arith.constant 0 : index
    %2 = vector.load %arg3[%c0_1, %c0_2] : memref<128x128xbf16, #tpu.memory_space<vmem>>, vector<128x128xbf16>
    %cst = arith.constant dense<0.000000e+00> : vector<16x128xf32>
    %3 = tpu.matmul %1, %2, %cst {dimension_numbers = #tpu.dot_dimension_numbers<[1], [0], [0], [1], [0, 0, 1, 1], [], []>} : vector<16x128xbf16>, vector<128x128xbf16>, vector<16x128xf32> -> vector<16x128xf32>
    %c0_3 = arith.constant 0 : index
    %c0_4 = arith.constant 0 : index
    %4 = vector.load %arg4[%c0_3, %c0_4] : memref<16x128xf32, #tpu.memory_space<vmem>>, vector<16x128xf32>
    tpu.vector_store %arg4[%c0_3, %c0_4], %3 {strides = array<i32>} : memref<16x128xf32, #tpu.memory_space<vmem>>, vector<16x128xf32>,
    return
  }
  func.func @transform_0(%arg0: i32, %arg1: i32) -> (i32, i32) {
    %c0_i32 = arith.constant 0 : i32
    %c0_i32_0 = arith.constant 0 : i32
    return %arg0, %c0_i32 : i32, i32
  }
  func.func @transform_1(%arg0: i32, %arg1: i32) -> (i32, i32) {
    %c0_i32 = arith.constant 0 : i32
    %c0_i32_0 = arith.constant 0 : i32
    return %c0_i32, %arg1 : i32, i32
  }
  func.func @transform_2(%arg0: i32, %arg1: i32) -> (i32, i32) {
    %c0_i32 = arith.constant 0 : i32
    return %arg0, %arg1 : i32, i32
  }
}

module attributes {stable_mosaic.version = 11 : i64} {
  func.func @gpt_blocks_kernel(%arg0: i32, %arg1: i32, %arg2: memref<2x8x128xf32, #tpu.memory_space<vmem>>, %arg3: memref<1x9x128xf32, #tpu.memory_space<vmem>>, %arg4: memref<1x128x512xbf16, #tpu.memory_space<vmem>>, %arg5: memref<1x128x128xbf16, #tpu.memory_space<vmem>>, %arg6: memref<2x128xf32, #tpu.memory_space<vmem>>, %arg7: memref<2x8x128xf32, #tpu.memory_space<vmem>>) attributes {dimension_semantics = [#tpu.dimension_semantics<parallel>, #tpu.dimension_semantics<arbitrary>], iteration_bounds = array<i64: 1, 2>, scalar_prefetch = 0 : i64, scratch_operands = 0 : i64, tpu.core_type = #tpu.core_type<tc>, window_params = [{transform_indices = @transform_0, window_bounds = array<i64: 2, 8, 128>}, {transform_indices = @transform_1, window_bounds = array<i64: 1, 9, 128>}, {transform_indices = @transform_2, window_bounds = array<i64: 1, 128, 512>}, {transform_indices = @transform_3, window_bounds = array<i64: 1, 128, 128>}, {pipeline_mode = #tpu.pipeline_mode<synchronous>, transform_indices = @transform_4, window_bounds = array<i64: 2, 128>}, {transform_indices = @transform_5, window_bounds = array<i64: 2, 8, 128>}]} {
    %c0_i32 = arith.constant 0 : i32
    %0 = arith.cmpi eq, %arg1, %c0_i32 : i32
    %1 = arith.extui %0 : i1 to i32
    %c0_i32_0 = arith.constant 0 : i32
    %2 = arith.cmpi ne, %1, %c0_i32_0 : i32
    scf.if %2 {
      %c0_59 = arith.constant 0 : index
      %c0_60 = arith.constant 0 : index
      %c0_61 = arith.constant 0 : index
      %139 = vector.load %arg2[%c0_59, %c0_60, %c0_61] : memref<2x8x128xf32, #tpu.memory_space<vmem>>, vector<2x8x128xf32>
      %c0_62 = arith.constant 0 : index
      %c0_63 = arith.constant 0 : index
      %c0_64 = arith.constant 0 : index
      %140 = vector.load %arg7[%c0_62, %c0_63, %c0_64] : memref<2x8x128xf32, #tpu.memory_space<vmem>>, vector<2x8x128xf32>
      tpu.vector_store %arg7[%c0_62, %c0_63, %c0_64], %139 {strides = array<i32>} : memref<2x8x128xf32, #tpu.memory_space<vmem>>, vector<2x8x128xf32>,
    } else {
    }
    %c0 = arith.constant 0 : index
    %c0_1 = arith.constant 0 : index
    %c0_2 = arith.constant 0 : index
    %3 = vector.load %arg7[%c0, %c0_1, %c0_2] : memref<2x8x128xf32, #tpu.memory_space<vmem>>, vector<2x8x128xf32>
    %4 = vector.shape_cast %3 : vector<2x8x128xf32> to vector<16x128xf32>
    %c0_3 = arith.constant 0 : index
    %c0_4 = arith.constant 0 : index
    %c0_5 = arith.constant 0 : index
    %5 = vector.load %arg3[%c0_3, %c0_4, %c0_5] : memref<1x9x128xf32, #tpu.memory_space<vmem>>, vector<1x1x128xf32>
    %6 = vector.shape_cast %5 : vector<1x1x128xf32> to vector<1x128xf32>
    %c0_6 = arith.constant 0 : index
    %c1 = arith.constant 1 : index
    %c0_7 = arith.constant 0 : index
    %7 = vector.load %arg3[%c0_6, %c1, %c0_7] : memref<1x9x128xf32, #tpu.memory_space<vmem>>, vector<1x1x128xf32>
    %8 = vector.shape_cast %7 : vector<1x1x128xf32> to vector<1x128xf32>
    %c0_8 = arith.constant 0 : index
    %c2 = arith.constant 2 : index
    %c0_9 = arith.constant 0 : index
    %9 = vector.load %arg3[%c0_8, %c2, %c0_9] : memref<1x9x128xf32, #tpu.memory_space<vmem>>, vector<1x1x128xf32>
    %10 = vector.shape_cast %9 : vector<1x1x128xf32> to vector<1x128xf32>
    %c0_10 = arith.constant 0 : index
    %c3 = arith.constant 3 : index
    %c0_11 = arith.constant 0 : index
    %11 = vector.load %arg3[%c0_10, %c3, %c0_11] : memref<1x9x128xf32, #tpu.memory_space<vmem>>, vector<1x1x128xf32>
    %12 = vector.shape_cast %11 : vector<1x1x128xf32> to vector<1x128xf32>
    %c0_12 = arith.constant 0 : index
    %c4 = arith.constant 4 : index
    %c0_13 = arith.constant 0 : index
    %13 = vector.load %arg3[%c0_12, %c4, %c0_13] : memref<1x9x128xf32, #tpu.memory_space<vmem>>, vector<1x1x128xf32>
    %14 = vector.shape_cast %13 : vector<1x1x128xf32> to vector<1x128xf32>
    %c0_14 = arith.constant 0 : index
    %c5 = arith.constant 5 : index
    %c0_15 = arith.constant 0 : index
    %15 = vector.load %arg3[%c0_14, %c5, %c0_15] : memref<1x9x128xf32, #tpu.memory_space<vmem>>, vector<1x1x128xf32>
    %16 = vector.shape_cast %15 : vector<1x1x128xf32> to vector<1x128xf32>
    %c0_16 = arith.constant 0 : index
    %c6 = arith.constant 6 : index
    %c0_17 = arith.constant 0 : index
    %17 = vector.load %arg3[%c0_16, %c6, %c0_17] : memref<1x9x128xf32, #tpu.memory_space<vmem>>, vector<1x1x128xf32>
    %18 = vector.shape_cast %17 : vector<1x1x128xf32> to vector<1x128xf32>
    %c0_18 = arith.constant 0 : index
    %c7 = arith.constant 7 : index
    %c0_19 = arith.constant 0 : index
    %19 = vector.load %arg3[%c0_18, %c7, %c0_19] : memref<1x9x128xf32, #tpu.memory_space<vmem>>, vector<1x1x128xf32>
    %20 = vector.shape_cast %19 : vector<1x1x128xf32> to vector<1x128xf32>
    %c0_20 = arith.constant 0 : index
    %c8 = arith.constant 8 : index
    %c0_21 = arith.constant 0 : index
    %21 = vector.load %arg3[%c0_20, %c8, %c0_21] : memref<1x9x128xf32, #tpu.memory_space<vmem>>, vector<1x1x128xf32>
    %22 = vector.shape_cast %21 : vector<1x1x128xf32> to vector<1x128xf32>
    %c0_22 = arith.constant 0 : index
    %c0_23 = arith.constant 0 : index
    %c0_24 = arith.constant 0 : index
    %23 = vector.load %arg4[%c0_22, %c0_23, %c0_24] : memref<1x128x512xbf16, #tpu.memory_space<vmem>>, vector<1x128x128xbf16>
    %24 = vector.shape_cast %23 : vector<1x128x128xbf16> to vector<128x128xbf16>
    %c0_25 = arith.constant 0 : index
    %c0_26 = arith.constant 0 : index
    %c128 = arith.constant 128 : index
    %25 = vector.load %arg4[%c0_25, %c0_26, %c128] : memref<1x128x512xbf16, #tpu.memory_space<vmem>>, vector<1x128x128xbf16>
    %26 = vector.shape_cast %25 : vector<1x128x128xbf16> to vector<128x128xbf16>
    %c0_27 = arith.constant 0 : index
    %c0_28 = arith.constant 0 : index
    %c256 = arith.constant 256 : index
    %27 = vector.load %arg4[%c0_27, %c0_28, %c256] : memref<1x128x512xbf16, #tpu.memory_space<vmem>>, vector<1x128x128xbf16>
    %28 = vector.shape_cast %27 : vector<1x128x128xbf16> to vector<128x128xbf16>
    %c0_29 = arith.constant 0 : index
    %c0_30 = arith.constant 0 : index
    %c384 = arith.constant 384 : index
    %29 = vector.load %arg4[%c0_29, %c0_30, %c384] : memref<1x128x512xbf16, #tpu.memory_space<vmem>>, vector<1x128x128xbf16>
    %30 = vector.shape_cast %29 : vector<1x128x128xbf16> to vector<128x128xbf16>
    %cst = arith.constant dense<0.000000e+00> : vector<16xf32>
    %31 = vector.multi_reduction <add>, %4, %cst [1] : vector<16x128xf32> to vector<16xf32>
    %32 = vector.shape_cast %31 : vector<16xf32> to vector<16x1xf32>
    %cst_31 = arith.constant 3.125000e-02 : f32
    %33 = vector.broadcast %cst_31 : f32 to vector<16x1xf32>
    %34 = arith.mulf %32, %33 : vector<16x1xf32>
    %35 = arith.mulf %4, %4 : vector<16x128xf32>
    %cst_32 = arith.constant dense<0.000000e+00> : vector<16xf32>
    %36 = vector.multi_reduction <add>, %35, %cst_32 [1] : vector<16x128xf32> to vector<16xf32>
    %37 = vector.shape_cast %36 : vector<16xf32> to vector<16x1xf32>
    %cst_33 = arith.constant 3.125000e-02 : f32
    %38 = vector.broadcast %cst_33 : f32 to vector<16x1xf32>
    %39 = arith.mulf %37, %38 : vector<16x1xf32>
    %40 = arith.mulf %34, %34 : vector<16x1xf32>
    %41 = arith.subf %39, %40 : vector<16x1xf32>
    %42 = vector.broadcast %34 : vector<16x1xf32> to vector<16x128xf32>
    %43 = arith.subf %4, %42 : vector<16x128xf32>
    %cst_34 = arith.constant 9.99999974E-6 : f32
    %44 = vector.broadcast %cst_34 : f32 to vector<16x1xf32>
    %45 = arith.addf %41, %44 : vector<16x1xf32>
    %46 = math.rsqrt %45 : vector<16x1xf32>
    %47 = vector.broadcast %46 : vector<16x1xf32> to vector<16x128xf32>
    %48 = arith.mulf %43, %47 : vector<16x128xf32>
    %49 = vector.broadcast %6 : vector<1x128xf32> to vector<16x128xf32>
    %50 = arith.mulf %48, %49 : vector<16x128xf32>
    %51 = vector.broadcast %8 : vector<1x128xf32> to vector<16x128xf32>
    %52 = arith.addf %50, %51 : vector<16x128xf32>
    %53 = arith.truncf %52 : vector<16x128xf32> to vector<16x128xbf16>
    %cst_35 = arith.constant dense<0.000000e+00> : vector<16x128xf32>
    %54 = tpu.matmul %53, %24, %cst_35 {dimension_numbers = #tpu.dot_dimension_numbers<[1], [0], [0], [1], [0, 0, 1, 1], [], []>} : vector<16x128xbf16>, vector<128x128xbf16>, vector<16x128xf32> -> vector<16x128xf32>
    %55 = vector.broadcast %10 : vector<1x128xf32> to vector<16x128xf32>
    %56 = arith.addf %54, %55 : vector<16x128xf32>
    %cst_36 = arith.constant dense<0.000000e+00> : vector<16x128xf32>
    %57 = tpu.matmul %53, %26, %cst_36 {dimension_numbers = #tpu.dot_dimension_numbers<[1], [0], [0], [1], [0, 0, 1, 1], [], []>} : vector<16x128xbf16>, vector<128x128xbf16>, vector<16x128xf32> -> vector<16x128xf32>
    %58 = vector.broadcast %12 : vector<1x128xf32> to vector<16x128xf32>
    %59 = arith.addf %57, %58 : vector<16x128xf32>
    %cst_37 = arith.constant dense<0.000000e+00> : vector<16x128xf32>
    %60 = tpu.matmul %53, %28, %cst_37 {dimension_numbers = #tpu.dot_dimension_numbers<[1], [0], [0], [1], [0, 0, 1, 1], [], []>} : vector<16x128xbf16>, vector<128x128xbf16>, vector<16x128xf32> -> vector<16x128xf32>
    %61 = vector.broadcast %14 : vector<1x128xf32> to vector<16x128xf32>
    %62 = arith.addf %60, %61 : vector<16x128xf32>
    %63 = vector.shape_cast %56 : vector<16x128xf32> to vector<2x8x128xf32>
    %64 = arith.truncf %63 : vector<2x8x128xf32> to vector<2x8x128xbf16>
    %65 = vector.shape_cast %59 : vector<16x128xf32> to vector<2x8x128xf32>
    %66 = arith.truncf %65 : vector<2x8x128xf32> to vector<2x8x128xbf16>
    %67 = vector.shape_cast %62 : vector<16x128xf32> to vector<2x8x128xf32>
    %68 = arith.truncf %67 : vector<2x8x128xf32> to vector<2x8x128xbf16>
    "tpu.trace_start"() <{level = 10 : i32, message = "bqh,bkh->bqk"}> : () -> ()
    %cst_38 = arith.constant dense<0.000000e+00> : vector<2x8x8xf32>
    %69 = tpu.matmul %64, %66, %cst_38 {dimension_numbers = #tpu.dot_dimension_numbers<[2], [2], [1], [1], [0, 0, 0, 1, 1, 1], [0], [0]>} : vector<2x8x128xbf16>, vector<2x8x128xbf16>, vector<2x8x8xf32> -> vector<2x8x8xf32>
    "tpu.trace_stop"() : () -> ()
    %70 = tpu.iota {dimensions = array<i32: 0>} : vector<8x8xi32>
    %71 = tpu.iota {dimensions = array<i32: 1>} : vector<8x8xi32>
    %72 = arith.cmpi sle, %71, %70 : vector<8x8xi32>
    %73 = vector.shape_cast %72 : vector<8x8xi1> to vector<1x8x8xi1>
    %cst_39 = arith.constant -1.000000e+30 : f32
    %74 = vector.shape_cast %73 : vector<1x8x8xi1> to vector<1x8x8xi1>
    %75 = vector.broadcast %74 : vector<1x8x8xi1> to vector<2x8x8xi1>
    %76 = vector.broadcast %cst_39 : f32 to vector<2x8x8xf32>
    %77 = arith.select %75, %69, %76 : vector<2x8x8xi1>, vector<2x8x8xf32>
    %cst_40 = arith.constant dense<0xFF800000> : vector<2x8xf32>
    %78 = vector.multi_reduction <maximumf>, %77, %cst_40 [2] : vector<2x8x8xf32> to vector<2x8xf32>
    %79 = vector.shape_cast %78 : vector<2x8xf32> to vector<2x8x1xf32>
    %80 = vector.broadcast %79 : vector<2x8x1xf32> to vector<2x8x8xf32>
    %81 = arith.subf %77, %80 : vector<2x8x8xf32>
    %82 = math.exp %81 : vector<2x8x8xf32>
    %cst_41 = arith.constant dense<0.000000e+00> : vector<2x8xf32>
    %83 = vector.multi_reduction <add>, %82, %cst_41 [2] : vector<2x8x8xf32> to vector<2x8xf32>
    %84 = vector.shape_cast %83 : vector<2x8xf32> to vector<2x8x1xf32>
    %85 = tpu.reciprocal %84 {approx = true} : vector<2x8x1xf32> -> vector<2x8x1xf32>
    %86 = vector.broadcast %85 : vector<2x8x1xf32> to vector<2x8x8xf32>
    %87 = arith.mulf %82, %86 : vector<2x8x8xf32>
    %88 = arith.truncf %87 : vector<2x8x8xf32> to vector<2x8x8xbf16>
    "tpu.trace_start"() <{level = 10 : i32, message = "bqk,bkd->bqd"}> : () -> ()
    %cst_42 = arith.constant dense<0.000000e+00> : vector<2x8x128xf32>
    %89 = tpu.matmul %88, %68, %cst_42 {dimension_numbers = #tpu.dot_dimension_numbers<[2], [1], [1], [2], [0, 0, 0, 1, 1, 2], [0], [0]>} : vector<2x8x8xbf16>, vector<2x8x128xbf16>, vector<2x8x128xf32> -> vector<2x8x128xf32>
    "tpu.trace_stop"() : () -> ()
    %90 = vector.shape_cast %89 : vector<2x8x128xf32> to vector<16x128xf32>
    %91 = arith.addf %4, %90 : vector<16x128xf32>
    %cst_43 = arith.constant dense<0.000000e+00> : vector<16xf32>
    %92 = vector.multi_reduction <add>, %91, %cst_43 [1] : vector<16x128xf32> to vector<16xf32>
    %93 = vector.shape_cast %92 : vector<16xf32> to vector<16x1xf32>
    %cst_44 = arith.constant 3.125000e-02 : f32
    %94 = vector.broadcast %cst_44 : f32 to vector<16x1xf32>
    %95 = arith.mulf %93, %94 : vector<16x1xf32>
    %96 = arith.mulf %91, %91 : vector<16x128xf32>
    %cst_45 = arith.constant dense<0.000000e+00> : vector<16xf32>
    %97 = vector.multi_reduction <add>, %96, %cst_45 [1] : vector<16x128xf32> to vector<16xf32>
    %98 = vector.shape_cast %97 : vector<16xf32> to vector<16x1xf32>
    %cst_46 = arith.constant 3.125000e-02 : f32
    %99 = vector.broadcast %cst_46 : f32 to vector<16x1xf32>
    %100 = arith.mulf %98, %99 : vector<16x1xf32>
    %101 = arith.mulf %95, %95 : vector<16x1xf32>
    %102 = arith.subf %100, %101 : vector<16x1xf32>
    %103 = vector.broadcast %95 : vector<16x1xf32> to vector<16x128xf32>
    %104 = arith.subf %91, %103 : vector<16x128xf32>
    %cst_47 = arith.constant 9.99999974E-6 : f32
    %105 = vector.broadcast %cst_47 : f32 to vector<16x1xf32>
    %106 = arith.addf %102, %105 : vector<16x1xf32>
    %107 = math.rsqrt %106 : vector<16x1xf32>
    %108 = vector.broadcast %107 : vector<16x1xf32> to vector<16x128xf32>
    %109 = arith.mulf %104, %108 : vector<16x128xf32>
    %110 = vector.broadcast %16 : vector<1x128xf32> to vector<16x128xf32>
    %111 = arith.mulf %109, %110 : vector<16x128xf32>
    %112 = vector.broadcast %18 : vector<1x128xf32> to vector<16x128xf32>
    %113 = arith.addf %111, %112 : vector<16x128xf32>
    %114 = arith.truncf %113 : vector<16x128xf32> to vector<16x128xbf16>
    %cst_48 = arith.constant dense<0.000000e+00> : vector<16x128xf32>
    %115 = tpu.matmul %114, %30, %cst_48 {dimension_numbers = #tpu.dot_dimension_numbers<[1], [0], [0], [1], [0, 0, 1, 1], [], []>} : vector<16x128xbf16>, vector<128x128xbf16>, vector<16x128xf32> -> vector<16x128xf32>
    %116 = vector.broadcast %20 : vector<1x128xf32> to vector<16x128xf32>
    %117 = arith.addf %115, %116 : vector<16x128xf32>
    %cst_49 = arith.constant 5.000000e-01 : f32
    %118 = vector.broadcast %cst_49 : f32 to vector<16x128xf32>
    %119 = arith.mulf %118, %117 : vector<16x128xf32>
    %cst_50 = arith.constant 0.707106769 : f32
    %120 = vector.broadcast %cst_50 : f32 to vector<16x128xf32>
    %121 = arith.mulf %117, %120 : vector<16x128xf32>
    %122 = math.erf %121 : vector<16x128xf32>
    %cst_51 = arith.constant 1.000000e+00 : f32
    %123 = vector.broadcast %cst_51 : f32 to vector<16x128xf32>
    %124 = arith.addf %123, %122 : vector<16x128xf32>
    %125 = arith.mulf %119, %124 : vector<16x128xf32>
    %126 = arith.truncf %125 : vector<16x128xf32> to vector<16x128xbf16>
    %c0_52 = arith.constant 0 : index
    %c0_53 = arith.constant 0 : index
    %c0_54 = arith.constant 0 : index
    %127 = vector.load %arg5[%c0_52, %c0_53, %c0_54] : memref<1x128x128xbf16, #tpu.memory_space<vmem>>, vector<1x128x128xbf16>
    %128 = vector.shape_cast %127 : vector<1x128x128xbf16> to vector<128x128xbf16>
    %cst_55 = arith.constant dense<0.000000e+00> : vector<16x128xf32>
    %129 = tpu.matmul %126, %128, %cst_55 {dimension_numbers = #tpu.dot_dimension_numbers<[1], [0], [0], [1], [0, 0, 1, 1], [], []>} : vector<16x128xbf16>, vector<128x128xbf16>, vector<16x128xf32> -> vector<16x128xf32>
    %130 = vector.broadcast %22 : vector<1x128xf32> to vector<16x128xf32>
    %131 = arith.addf %129, %130 : vector<16x128xf32>
    %132 = arith.addf %91, %131 : vector<16x128xf32>
    %c1_i32 = arith.constant 1 : i32
    %133 = arith.cmpi slt, %arg1, %c1_i32 : i32
    %134 = arith.extui %133 : i1 to i32
    %c0_i32_56 = arith.constant 0 : i32
    %135 = arith.cmpi ne, %134, %c0_i32_56 : i32
    scf.if %135 {
      %139 = vector.shape_cast %132 : vector<16x128xf32> to vector<2x8x128xf32>
      %c0_59 = arith.constant 0 : index
      %c0_60 = arith.constant 0 : index
      %c0_61 = arith.constant 0 : index
      %140 = vector.load %arg7[%c0_59, %c0_60, %c0_61] : memref<2x8x128xf32, #tpu.memory_space<vmem>>, vector<2x8x128xf32>
      tpu.vector_store %arg7[%c0_59, %c0_60, %c0_61], %139 {strides = array<i32>} : memref<2x8x128xf32, #tpu.memory_space<vmem>>, vector<2x8x128xf32>,
    } else {
    }
    %c1_i32_57 = arith.constant 1 : i32
    %136 = arith.cmpi eq, %arg1, %c1_i32_57 : i32
    %137 = arith.extui %136 : i1 to i32
    %c0_i32_58 = arith.constant 0 : i32
    %138 = arith.cmpi ne, %137, %c0_i32_58 : i32
    scf.if %138 {
      %c0_59 = arith.constant 0 : index
      %c0_60 = arith.constant 0 : index
      %139 = vector.load %arg6[%c0_59, %c0_60] : memref<2x128xf32, #tpu.memory_space<vmem>>, vector<1x128xf32>
      %c1_61 = arith.constant 1 : index
      %c0_62 = arith.constant 0 : index
      %140 = vector.load %arg6[%c1_61, %c0_62] : memref<2x128xf32, #tpu.memory_space<vmem>>, vector<1x128xf32>
      %cst_63 = arith.constant dense<0.000000e+00> : vector<16xf32>
      %141 = vector.multi_reduction <add>, %132, %cst_63 [1] : vector<16x128xf32> to vector<16xf32>
      %142 = vector.shape_cast %141 : vector<16xf32> to vector<16x1xf32>
      %cst_64 = arith.constant 3.125000e-02 : f32
      %143 = vector.broadcast %cst_64 : f32 to vector<16x1xf32>
      %144 = arith.mulf %142, %143 : vector<16x1xf32>
      %145 = arith.mulf %132, %132 : vector<16x128xf32>
      %cst_65 = arith.constant dense<0.000000e+00> : vector<16xf32>
      %146 = vector.multi_reduction <add>, %145, %cst_65 [1] : vector<16x128xf32> to vector<16xf32>
      %147 = vector.shape_cast %146 : vector<16xf32> to vector<16x1xf32>
      %cst_66 = arith.constant 3.125000e-02 : f32
      %148 = vector.broadcast %cst_66 : f32 to vector<16x1xf32>
      %149 = arith.mulf %147, %148 : vector<16x1xf32>
      %150 = arith.mulf %144, %144 : vector<16x1xf32>
      %151 = arith.subf %149, %150 : vector<16x1xf32>
      %152 = vector.broadcast %144 : vector<16x1xf32> to vector<16x128xf32>
      %153 = arith.subf %132, %152 : vector<16x128xf32>
      %cst_67 = arith.constant 9.99999974E-6 : f32
      %154 = vector.broadcast %cst_67 : f32 to vector<16x1xf32>
      %155 = arith.addf %151, %154 : vector<16x1xf32>
      %156 = math.rsqrt %155 : vector<16x1xf32>
      %157 = vector.broadcast %156 : vector<16x1xf32> to vector<16x128xf32>
      %158 = arith.mulf %153, %157 : vector<16x128xf32>
      %159 = vector.broadcast %139 : vector<1x128xf32> to vector<16x128xf32>
      %160 = arith.mulf %158, %159 : vector<16x128xf32>
      %161 = vector.broadcast %140 : vector<1x128xf32> to vector<16x128xf32>
      %162 = arith.addf %160, %161 : vector<16x128xf32>
      %163 = vector.shape_cast %162 : vector<16x128xf32> to vector<2x8x128xf32>
      %c0_68 = arith.constant 0 : index
      %c0_69 = arith.constant 0 : index
      %c0_70 = arith.constant 0 : index
      %164 = vector.load %arg7[%c0_68, %c0_69, %c0_70] : memref<2x8x128xf32, #tpu.memory_space<vmem>>, vector<2x8x128xf32>
      tpu.vector_store %arg7[%c0_68, %c0_69, %c0_70], %163 {strides = array<i32>} : memref<2x8x128xf32, #tpu.memory_space<vmem>>, vector<2x8x128xf32>,
    } else {
    }
    return
  }
  func.func @transform_0(%arg0: i32, %arg1: i32) -> (i32, i32, i32) {
    %c0_i32 = arith.constant 0 : i32
    %c0_i32_0 = arith.constant 0 : i32
    %c0_i32_1 = arith.constant 0 : i32
    return %arg0, %c0_i32, %c0_i32_0 : i32, i32, i32
  }
  func.func @transform_1(%arg0: i32, %arg1: i32) -> (i32, i32, i32) {
    %c0_i32 = arith.constant 0 : i32
    %c0_i32_0 = arith.constant 0 : i32
    %c0_i32_1 = arith.constant 0 : i32
    return %arg1, %c0_i32, %c0_i32_0 : i32, i32, i32
  }
  func.func @transform_2(%arg0: i32, %arg1: i32) -> (i32, i32, i32) {
    %c0_i32 = arith.constant 0 : i32
    %c0_i32_0 = arith.constant 0 : i32
    %c0_i32_1 = arith.constant 0 : i32
    return %arg1, %c0_i32, %c0_i32_0 : i32, i32, i32
  }
  func.func @transform_3(%arg0: i32, %arg1: i32) -> (i32, i32, i32) {
    %c0_i32 = arith.constant 0 : i32
    %c0_i32_0 = arith.constant 0 : i32
    %c0_i32_1 = arith.constant 0 : i32
    return %arg1, %c0_i32, %c0_i32_0 : i32, i32, i32
  }
  func.func @transform_4(%arg0: i32, %arg1: i32) -> (i32, i32) {
    %c0_i32 = arith.constant 0 : i32
    %c0_i32_0 = arith.constant 0 : i32
    %c0_i32_1 = arith.constant 0 : i32
    return %c0_i32, %c0_i32_0 : i32, i32
  }
  func.func @transform_5(%arg0: i32, %arg1: i32) -> (i32, i32, i32) {
    %c0_i32 = arith.constant 0 : i32
    %c0_i32_0 = arith.constant 0 : i32
    %c0_i32_1 = arith.constant 0 : i32
    return %arg0, %c0_i32, %c0_i32_0 : i32, i32, i32
  }
}

</mosaic_0001>

<llo_original>
// kernel: gpt_forward.3
$region0: #{gpt_forward.3}
  #allocation0 [shape = 'u32[]', space=smem, size = 0x4, offset = 0x4, fixed_abs, tag = 'smem constant byte address 0x4 - core index']
  #allocation1 [shape = 'u32[72,128]{1,0:T(1,128)}', space=vmem, size = 0x9000, scoped, tag = 'internal scratch']
  %s0 = inlined_call_operand.vmem [shape: f32[16,128], index: 0, kind: input, shape index: {}]
  %s1 = inlined_call_operand.vmem [shape: bf16[128,128], index: 1, kind: input, shape index: {}]
  %s2 = inlined_call_operand.vmem [shape: f32[16,128], index: 2, kind: output, shape index: {}]
  %s3 = sld [smem:[#allocation0]]
  $region18: #{gpt_forward.3} parent=0
    _
  %s5 = ssub.s32 1, %s3
  %s6 = scalar_select 0, %s5, %s3
  // Predicated region
  $region2: #{gpt_forward.3} parent=0 // pred_check
    _
  $region3: #{gpt_forward.3} parent=0 // pred_check_branch
    %8 = sbr.rel (0) target = $region5
  $region4: #{gpt_forward.3} parent=0 // pred_region
    _
  $region5: #{gpt_forward.3} parent=0 // pred_fallthru
    _
  // Predicated region
  $region6: #{gpt_forward.3} parent=0 // pred_check
    _
  $region7: #{gpt_forward.3} parent=0 // pred_check_branch
    %10 = sbr.rel (0) target = $region9
  $region8: #{gpt_forward.3} parent=0 // pred_region
    _
  $region9: #{gpt_forward.3} parent=0 // pred_fallthru
    _
  %v11 = vld [vmem:[%s0] sm:$0xff]
  %v12 = vld [vmem:[%s0 + $0x8] sm:$0xff]
  %v13 = vpack.c.bf16 %v12, %v11
  %v14 = vld [vmem:[%s1] sm:$0xf]
  %v15 = vld [vmem:[%s1 + $0x4] sm:$0xf]
  %v16 = vld [vmem:[%s1 + $0x8] sm:$0xf]
  %v17 = vld [vmem:[%s1 + $0xc] sm:$0xf]
  %v18 = vld [vmem:[%s1 + $0x10] sm:$0xf]
  %v19 = vld [vmem:[%s1 + $0x14] sm:$0xf]
  %v20 = vld [vmem:[%s1 + $0x18] sm:$0xf]
  %v21 = vld [vmem:[%s1 + $0x1c] sm:$0xf]
  %v22 = vld [vmem:[%s1 + $0x20] sm:$0xf]
  %v23 = vld [vmem:[%s1 + $0x24] sm:$0xf]
  %v24 = vld [vmem:[%s1 + $0x28] sm:$0xf]
  %v25 = vld [vmem:[%s1 + $0x2c] sm:$0xf]
  %v26 = vld [vmem:[%s1 + $0x30] sm:$0xf]
  %v27 = vld [vmem:[%s1 + $0x34] sm:$0xf]
  %v28 = vld [vmem:[%s1 + $0x38] sm:$0xf]
  %v29 = vld [vmem:[%s1 + $0x3c] sm:$0xf]
  %v46 = vunpack.c.l.b16 %v14
  %v47 = vunpack.c.l.b16 %v15
  %v48 = vunpack.c.l.b16 %v16
  %v49 = vunpack.c.l.b16 %v17
  %v50 = vunpack.c.l.b16 %v18
  %v51 = vunpack.c.l.b16 %v19
  %v52 = vunpack.c.l.b16 %v20
  %v53 = vunpack.c.l.b16 %v21
  %v54 = vunpack.c.l.b16 %v22
  %v55 = vunpack.c.l.b16 %v23
  %v56 = vunpack.c.l.b16 %v24
  %v57 = vunpack.c.l.b16 %v25
  %v58 = vunpack.c.l.b16 %v26
  %v59 = vunpack.c.l.b16 %v27
  %v60 = vunpack.c.l.b16 %v28
  %v61 = vunpack.c.l.b16 %v29
  %v62 = vpack.c.b16 %v47, %v46
  %v63 = vpack.c.b16 %v49, %v48
  %v64 = vpack.c.b16 %v51, %v50
  %v65 = vpack.c.b16 %v53, %v52
  %v66 = vpack.c.b16 %v55, %v54
  %v67 = vpack.c.b16 %v57, %v56
  %v68 = vpack.c.b16 %v59, %v58
  %v69 = vpack.c.b16 %v61, %v60
  %78 = vmatpush.bf16.msra.mxu0 %v69
  %79 = vmatpush.bf16.msra.mxu0 %v68
  %80 = vmatpush.bf16.msra.mxu0 %v67
  %81 = vmatpush.bf16.msra.mxu0 %v66
  %82 = vmatpush.bf16.msra.mxu0 %v65
  %83 = vmatpush.bf16.msra.mxu0 %v64
  %84 = vmatpush.bf16.msra.mxu0 %v63
  %85 = vmatpush.bf16.msra.mxu0 %v62
  %86 = vmatmul.bf16.gmra.mxu0 %v13
  %v87 = vpop.f32.mrf.mxu0
  %v88 = vadd.f32 0.0, %v87
  %v89 = vpop.f32.mrf.mxu0
  %v90 = vadd.f32 0.0, %v89
  %91 = vdwg.mxu0
  %92 = vst [vmem:[%s2] sm:$0xff] %v88
  %93 = vst [vmem:[%s2 + $0x8] sm:$0xff] %v90
  // Predicated region
  $region10: #{gpt_forward.3} parent=0 // pred_check
    _
  $region11: #{gpt_forward.3} parent=0 // pred_check_branch
    %95 = sbr.rel (0) target = $region13
  $region12: #{gpt_forward.3} parent=0 // pred_region
    _
  $region13: #{gpt_forward.3} parent=0 // pred_fallthru
    _
  // Predicated region
  $region14: #{gpt_forward.3} parent=0 // pred_check
    _
  $region15: #{gpt_forward.3} parent=0 // pred_check_branch
    %97 = sbr.rel (0) target = $region17
  $region16: #{gpt_forward.3} parent=0 // pred_region
    _
  $region17: #{gpt_forward.3} parent=0 // pred_fallthru
    _

// kernel: gpt_forward.2
$region0: #{gpt_forward.2}
  #allocation0 [shape = 'u32[]', space=smem, size = 0x4, offset = 0x4, fixed_abs, tag = 'smem constant byte address 0x4 - core index']
  #allocation1 [shape = 'u32[72,128]{1,0:T(1,128)}', space=vmem, size = 0x9000, scoped, tag = 'internal scratch']
  %s0 = inlined_call_operand.vmem [shape: f32[2,8,128], index: 0, kind: input, shape index: {}]
  %s1 = inlined_call_operand.vmem [shape: f32[2,9,128], index: 1, kind: input, shape index: {}]
  %s2 = inlined_call_operand.hbm [shape: bf16[2,128,512], index: 2, kind: input, shape index: {}]
  %s3 = inlined_call_operand.vmem [shape: bf16[2,128,128], index: 3, kind: input, shape index: {}]
  %s4 = inlined_call_operand.vmem [shape: f32[2,128], index: 4, kind: input, shape index: {}]
  %s5 = inlined_call_operand.vmem [shape: f32[2,8,128], index: 5, kind: output, shape index: {}]
  %s6 = sld [smem:[#allocation0]]
  $region69: #{gpt_forward.2} parent=0
    _
  %s8 = ssub.s32 1, %s6
  %s9 = scalar_select 0, %s8, %s6
  $region1: #{gpt_forward.2} parent=0
    #allocation2 [shape = 'u8[262144]{0}', space=vmem, size = 0x40000, scoped, tag = 'input window, operand 2']
    #allocation3 [shape = 's32[2]{0}', space=sflag, size = 0x8, scoped, tag = 'scoped memory for gpt_forward.2']
    %10 = vsyncpa [#allocation3], 0
    %s11 = scalar_lea.sflag [#allocation3], 1
    %12 = vsyncpa %s11, 0
    loop: start=0, step=1, limit=4
    $region2: #{gpt_forward.2} parent=1 // loop_pre_header
      _
    $region3: #{gpt_forward.2} parent=1 // loop_header
      %s14 = sphi 0, %s18
      %p15 = scmp.ge.s32.totalorder %s14, 4
      %s21 = sphi 0, %s33
      %s22 = sphi 0, %s29
      %s23 = sphi 0, %s21
      %s24 = sphi 0, %s22
      %s25 = sphi 0, %s23
      %s26 = sphi 0, %s24
      %s36 = sphi 0, %s38
      %s39 = sphi 0, %s36
      %s40 = sphi 0, %s39
      %s56 = sphi 0, %s40
      %s62 = sphi 0, %s64
      %s65 = sphi 0, %s62
      %s66 = sphi 0, %s65
      %s82 = sphi 0, %s66
      %s88 = sphi 0, %s90
      %s91 = sphi 0, %s88
      %s92 = sphi 0, %s91
      %s108 = sphi 0, %s92
      %s114 = sphi 0, %s116
      %s117 = sphi 0, %s114
      %s118 = sphi 0, %s117
      %s134 = sphi 0, %s118
      %s138 = sphi 0, %s138
      %s140 = sphi 0, %s138
      %s141 = sphi 0, %s140
      %s155 = sphi 0, %s141
      %s161 = sphi 0, %s163
      %s164 = sphi 0, %s161
      %s165 = sphi 0, %s164
      %s181 = sphi 0, %s165
    $region4: #{gpt_forward.2} parent=1 // loop_header_branch
      %17 = sbr.rel (%p15) target = $region8
    $region5: #{gpt_forward.2} parent=1 // loop_body
      %s19 = ssub.s32 %s14, 1
      %s20 = ssub.s32 %s14, 2
      %s27 = sadd.s32 1, %s22
      %p28 = scmp.ge.s32.totalorder %s27, 2
      %s29 = scalar_select %p28, 0, %s27
      %s30 = sadd.s32 1, %s21
      %s31 = scalar_select %p28, %s30, %s21
      %p32 = scmp.ge.s32.totalorder %s31, 1
      %s33 = scalar_select %p32, 0, %s31
      %s34 = ssub.s32 %s21, %s33
      %p35 = scmp.eq.s32.totalorder %s34, 0
      %s37 = sadd.s32 %s36, 1
      %s38 = scalar_select %p35, %s36, %s37
      %p41 = pneg %p35
      %p42 = scmp.eq.s32.totalorder %s14, 1
      %p43 = por %p41, %p42
      %p44 = scmp.ne.s32.totalorder %s36, %s39
      %p45 = scmp.eq.s32.totalorder %s14, 0
      %p46 = por %p44, %p45
      %p47 = scmp.ne.s32.totalorder %s36, %s39
      %p48 = scmp.eq.s32.totalorder %s19, 1
      %p49 = por %p47, %p48
      %p50 = scmp.ne.s32.totalorder %s39, %s40
      %p51 = scmp.eq.s32.totalorder %s19, 0
      %p52 = por %p50, %p51
      %p53 = scmp.ne.s32.totalorder %s39, %s40
      %p54 = scmp.eq.s32.totalorder %s20, 1
      %p55 = por %p53, %p54
      %p57 = scmp.ne.s32.totalorder %s40, %s56
      %p58 = scmp.eq.s32.totalorder %s20, 0
      %p59 = por %p57, %p58
      %s60 = ssub.s32 %s22, %s29
      %p61 = scmp.eq.s32.totalorder %s60, 0
      %s63 = sadd.s32 %s62, 1
      %s64 = scalar_select %p61, %s62, %s63
      %p67 = pneg %p61
      %p68 = scmp.eq.s32.totalorder %s14, 1
      %p69 = por %p67, %p68
      %p70 = scmp.ne.s32.totalorder %s62, %s65
      %p71 = scmp.eq.s32.totalorder %s14, 0
      %p72 = por %p70, %p71
      %p73 = scmp.ne.s32.totalorder %s62, %s65
      %p74 = scmp.eq.s32.totalorder %s19, 1
      %p75 = por %p73, %p74
      %p76 = scmp.ne.s32.totalorder %s65, %s66
      %p77 = scmp.eq.s32.totalorder %s19, 0
      %p78 = por %p76, %p77
      %p79 = scmp.ne.s32.totalorder %s65, %s66
      %p80 = scmp.eq.s32.totalorder %s20, 1
      %p81 = por %p79, %p80
      %p83 = scmp.ne.s32.totalorder %s66, %s82
      %p84 = scmp.eq.s32.totalorder %s20, 0
      %p85 = por %p83, %p84
      %s86 = ssub.s32 %s22, %s29
      %p87 = scmp.eq.s32.totalorder %s86, 0
      %s89 = sadd.s32 %s88, 1
      %s90 = scalar_select %p87, %s88, %s89
      %p93 = pneg %p87
      %p94 = scmp.eq.s32.totalorder %s14, 1
      %p95 = por %p93, %p94
      %p96 = scmp.ne.s32.totalorder %s88, %s91
      %p97 = scmp.eq.s32.totalorder %s14, 0
      %p98 = por %p96, %p97
      %p99 = scmp.ne.s32.totalorder %s88, %s91
      %p100 = scmp.eq.s32.totalorder %s19, 1
      %p101 = por %p99, %p100
      %p102 = scmp.ne.s32.totalorder %s91, %s92
      %p103 = scmp.eq.s32.totalorder %s19, 0
      %p104 = por %p102, %p103
      %p105 = scmp.ne.s32.totalorder %s91, %s92
      %p106 = scmp.eq.s32.totalorder %s20, 1
      %p107 = por %p105, %p106
      %p109 = scmp.ne.s32.totalorder %s92, %s108
      %p110 = scmp.eq.s32.totalorder %s20, 0
      %p111 = por %p109, %p110
      %s112 = ssub.s32 %s22, %s29
      %p113 = scmp.eq.s32.totalorder %s112, 0
      %s115 = sadd.s32 %s114, 1
      %s116 = scalar_select %p113, %s114, %s115
      %p119 = pneg %p113
      %p120 = scmp.eq.s32.totalorder %s14, 1
      %p121 = por %p119, %p120
      %p122 = scmp.ne.s32.totalorder %s114, %s117
      %p123 = scmp.eq.s32.totalorder %s14, 0
      %p124 = por %p122, %p123
      %p125 = scmp.ne.s32.totalorder %s114, %s117
      %p126 = scmp.eq.s32.totalorder %s19, 1
      %p127 = por %p125, %p126
      %p128 = scmp.ne.s32.totalorder %s117, %s118
      %p129 = scmp.eq.s32.totalorder %s19, 0
      %p130 = por %p128, %p129
      %p131 = scmp.ne.s32.totalorder %s117, %s118
      %p132 = scmp.eq.s32.totalorder %s20, 1
      %p133 = por %p131, %p132
      %p135 = scmp.ne.s32.totalorder %s118, %s134
      %p136 = scmp.eq.s32.totalorder %s20, 0
      %p137 = por %p135, %p136
      %s139 = sadd.s32 %s138, 1
      %p142 = scmp.eq.s32.totalorder %s14, 1
      %p143 = scmp.ne.s32.totalorder %s138, %s140
      %p144 = scmp.eq.s32.totalorder %s14, 0
      %p145 = por %p143, %p144
      %p146 = scmp.ne.s32.totalorder %s138, %s140
      %p147 = scmp.eq.s32.totalorder %s19, 1
      %p148 = por %p146, %p147
      %p149 = scmp.ne.s32.totalorder %s140, %s141
      %p150 = scmp.eq.s32.totalorder %s19, 0
      %p151 = por %p149, %p150
      %p152 = scmp.ne.s32.totalorder %s140, %s141
      %p153 = scmp.eq.s32.totalorder %s20, 1
      %p154 = por %p152, %p153
      %p156 = scmp.ne.s32.totalorder %s141, %s155
      %p157 = scmp.eq.s32.totalorder %s20, 0
      %p158 = por %p156, %p157
      %s159 = ssub.s32 %s21, %s33
      %p160 = scmp.eq.s32.totalorder %s159, 0
      %s162 = sadd.s32 %s161, 1
      %s163 = scalar_select %p160, %s161, %s162
      %p166 = pneg %p160
      %p167 = scmp.eq.s32.totalorder %s14, 1
      %p168 = por %p166, %p167
      %p169 = scmp.ne.s32.totalorder %s161, %s164
      %p170 = scmp.eq.s32.totalorder %s14, 0
      %p171 = por %p169, %p170
      %p172 = scmp.ne.s32.totalorder %s161, %s164
      %p173 = scmp.eq.s32.totalorder %s19, 1
      %p174 = por %p172, %p173
      %p175 = scmp.ne.s32.totalorder %s164, %s165
      %p176 = scmp.eq.s32.totalorder %s19, 0
      %p177 = por %p175, %p176
      %p178 = scmp.ne.s32.totalorder %s164, %s165
      %p179 = scmp.eq.s32.totalorder %s20, 1
      %p180 = por %p178, %p179
      %p182 = scmp.ne.s32.totalorder %s165, %s181
      %p183 = scmp.eq.s32.totalorder %s20, 0
      %p184 = por %p182, %p183
      %p185 = scmp.le.s32.totalorder 1, %s14
      %p186 = scmp.lt.s32.totalorder %s14, 3
      %p187 = pnand %p185, %p186
      %p188 = pneg %p187
      // Predicated region
      $region9: #{gpt_forward.2} parent=5 // pred_check
        _
      $region10: #{gpt_forward.2} parent=5 // pred_check_branch
        %190 = sbr.rel (%p187) target = $region12
      $region11: #{gpt_forward.2} parent=5 // pred_region
        %s191 = ssub.s32 %s14, 1
        // Predicated region
        $region13: #{gpt_forward.2} parent=11 // pred_check
          %p192 = pneg %p52
        $region14: #{gpt_forward.2} parent=11 // pred_check_branch
          %194 = sbr.rel (%p192) target = $region16
        $region15: #{gpt_forward.2} parent=11 // pred_region
          %s195 = smul.u32 2, %s23
          %p196 = scmp.lt.s32.totalorder %s195, 1
          %s197 = scalar_select %p196, %s195, 1
          %s198 = smul.addr %s197, 8
          %s199 = scalar_lea.vmem %s0, %s198
          %s200 = smul.u32 2, %s23
        $region16: #{gpt_forward.2} parent=11 // pred_fallthru
          _
        // Predicated region
        $region17: #{gpt_forward.2} parent=11 // pred_check
          %p201 = pneg %p151
        $region18: #{gpt_forward.2} parent=11 // pred_check_branch
          %203 = sbr.rel (%p201) target = $region20
        $region19: #{gpt_forward.2} parent=11 // pred_region
          _
        $region20: #{gpt_forward.2} parent=11 // pred_fallthru
          _
      $region12: #{gpt_forward.2} parent=5 // pred_fallthru
        _
      %p204 = scmp.lt.s32.totalorder %s14, 2
      // Predicated region
      $region21: #{gpt_forward.2} parent=5 // pred_check
        %p205 = pneg %p204
      $region22: #{gpt_forward.2} parent=5 // pred_check_branch
        %207 = sbr.rel (%p205) target = $region24
      $region23: #{gpt_forward.2} parent=5 // pred_region
        // Predicated region
        $region25: #{gpt_forward.2} parent=23 // pred_check
          %p208 = pneg %p72
        $region26: #{gpt_forward.2} parent=23 // pred_check_branch
          %210 = sbr.rel (%p208) target = $region28
        $region27: #{gpt_forward.2} parent=23 // pred_region
          %p211 = scmp.lt.s32.totalorder %s22, 1
          %s212 = scalar_select %p211, %s22, 1
          %s213 = smul.addr %s212, 2
          %s214 = smul.addr %s213, 8
          %s215 = scalar_lea.vmem %s1, %s214
        $region28: #{gpt_forward.2} parent=23 // pred_fallthru
          _
        // Predicated region
        $region29: #{gpt_forward.2} parent=23 // pred_check
          %p216 = pneg %p98
        $region30: #{gpt_forward.2} parent=23 // pred_check_branch
          %218 = sbr.rel (%p216) target = $region32
        $region31: #{gpt_forward.2} parent=23 // pred_region
          %s219 = sand.u32 %s88, 1
          %s220 = scalar_lea.sflag [#allocation3], %s219
          %s221 = sand.u32 %s88, 1
          %s222 = smul.addr %s221, 256
          %s223 = scalar_lea.vmem [#allocation2], %s222
          %225 = vsyncadd %s220, 0
          %s226 = smul.addr %s22, 64
          %s227 = smul.addr %s226, 4
          %s228 = scalar_lea.hbm %s2, %s227
          %s229 = sshll.u32 %s228, 4
          %s230 = int_to_ptr.hbm [resolvable:$true] %s229
          %s231 = sshll.u32 %s223, 4
          %s232 = int_to_ptr.vmem [resolvable:$true] %s231
          %237 = dma.hbm_to_vmem [thread:$0]  %s230, 4096, %s232, %s220, 256, 256, 16
        $region32: #{gpt_forward.2} parent=23 // pred_fallthru
          _
        // Predicated region
        $region33: #{gpt_forward.2} parent=23 // pred_check
          %p238 = pneg %p124
        $region34: #{gpt_forward.2} parent=23 // pred_check_branch
          %240 = sbr.rel (%p238) target = $region36
        $region35: #{gpt_forward.2} parent=23 // pred_region
          %p241 = scmp.lt.s32.totalorder %s22, 1
          %s242 = scalar_select %p241, %s22, 1
          %s243 = smul.addr %s242, 16
          %s244 = smul.addr %s243, 4
          %s245 = scalar_lea.vmem %s3, %s244
        $region36: #{gpt_forward.2} parent=23 // pred_fallthru
          _
      $region24: #{gpt_forward.2} parent=5 // pred_fallthru
        _
      %p246 = scmp.le.s32.totalorder 1, %s14
      %p247 = scmp.lt.s32.totalorder %s14, 3
      %p248 = pnand %p246, %p247
      %p249 = pneg %p248
      // Predicated region
      $region37: #{gpt_forward.2} parent=5 // pred_check
        _
      $region38: #{gpt_forward.2} parent=5 // pred_check_branch
        %251 = sbr.rel (%p248) target = $region40
      $region39: #{gpt_forward.2} parent=5 // pred_region
        %s252 = ssub.s32 %s14, 1
        %s253 = sand.u32 %s91, 1
        %s254 = scalar_lea.sflag [#allocation3], %s253
        %s255 = sand.u32 %s91, 1
        %s256 = smul.addr %s255, 256
        %s257 = scalar_lea.vmem [#allocation2], %s256
        // Predicated region
        $region41: #{gpt_forward.2} parent=39 // pred_check
          %p258 = pneg %p104
        $region42: #{gpt_forward.2} parent=39 // pred_check_branch
          %260 = sbr.rel (%p258) target = $region44
        $region43: #{gpt_forward.2} parent=39 // pred_region
          %262 = dma.done %s254, 4096
        $region44: #{gpt_forward.2} parent=39 // pred_fallthru
          _
        %s263 = smul.u32 2, %s23
        %p264 = scmp.lt.s32.totalorder %s263, 1
        %s265 = scalar_select %p264, %s263, 1
        %s266 = smul.addr %s265, 8
        %s267 = scalar_lea.vmem %s0, %s266
        %p268 = pneg %p52
        %p269 = pneg %p49
        %p270 = scmp.lt.s32.totalorder %s24, 1
        %s271 = scalar_select %p270, %s24, 1
        %s272 = smul.addr %s271, 2
        %s273 = smul.addr %s272, 8
        %s274 = scalar_lea.vmem %s1, %s273
        %p275 = pneg %p78
        %p276 = pneg %p75
        %s277 = sand.u32 %s91, 1
        %s278 = scalar_lea.sflag [#allocation3], %s277
        %s279 = sand.u32 %s91, 1
        %s280 = smul.addr %s279, 256
        %s281 = scalar_lea.vmem [#allocation2], %s280
        %p282 = pneg %p104
        %p283 = pneg %p101
        %p284 = scmp.lt.s32.totalorder %s24, 1
        %s285 = scalar_select %p284, %s24, 1
        %s286 = smul.addr %s285, 16
        %s287 = smul.addr %s286, 4
        %s288 = scalar_lea.vmem %s3, %s287
        %p289 = pneg %p130
        %p290 = pneg %p127
        %p291 = pneg %p151
        %p292 = pneg %p148
        %p293 = pneg %p177
        %p294 = pneg %p174
        %s295 = smul.u32 2, %s23
        %p296 = scmp.lt.s32.totalorder %s295, 1
        %s297 = scalar_select %p296, %s295, 1
        %s298 = smul.addr %s297, 8
        %s299 = scalar_lea.vmem %s5, %s298
        %s300 = smul.u32 2, %s23
        %p301 = scmp.lt.s32.totalorder %s300, 1
        %s302 = scalar_select %p301, %s300, 1
        %s303 = smul.addr %s302, 8
        %s304 = scalar_lea.vmem %s0, %s303
        %s305 = smul.u32 2, %s23
        %p306 = scmp.lt.s32.totalorder %s24, 1
        %s307 = scalar_select %p306, %s24, 1
        %s308 = smul.addr %s307, 2
        %s309 = smul.addr %s308, 8
        %s310 = scalar_lea.vmem %s1, %s309
        %p311 = scmp.lt.s32.totalorder %s24, 1
        %s312 = scalar_select %p311, %s24, 1
        %s313 = smul.addr %s312, 16
        %s314 = smul.addr %s313, 4
        %s315 = scalar_lea.vmem %s3, %s314
        %s316 = smul.u32 2, %s23
        %p317 = scmp.lt.s32.totalorder %s316, 1
        %s318 = scalar_select %p317, %s316, 1
        %s319 = smul.addr %s318, 8
        %s320 = scalar_lea.vmem %s5, %s319
        %s321 = smul.u32 2, %s23
        %p323 = scmp.eq.s32.totalorder %s24, 0
        // Predicated region
        $region45: #{gpt_forward.2} parent=39 // pred_check
          %p324 = pneg %p323
        $region46: #{gpt_forward.2} parent=39 // pred_check_branch
          %326 = sbr.rel (%p324) target = $region48
        $region47: #{gpt_forward.2} parent=39 // pred_region
          %v327 = vld [vmem:[%s304] sm:$0xff]
          %v328 = vld [vmem:[%s304 + $0x8] sm:$0xff]
          %329 = vst [vmem:[%s320] sm:$0xff] %v327
          %330 = vst [vmem:[%s320 + $0x8] sm:$0xff] %v328
        $region48: #{gpt_forward.2} parent=39 // pred_fallthru
          _
        %v331 = vld [vmem:[%s320] sm:$0xff]
        %v332 = vld [vmem:[%s320 + $0x8] sm:$0xff]
        %v333 = vld [vmem:[%s310] sm:$0x1]
        %v334 = vld [vmem:[%s310 + $0x1] sm:$0x1]
        %v335 = vld [vmem:[%s310 + $0x2] sm:$0x1]
        %v336 = vld [vmem:[%s310 + $0x3] sm:$0x1]
        %v337 = vld [vmem:[%s310 + $0x4] sm:$0x1]
        %v338 = vld [vmem:[%s310 + $0x5] sm:$0x1]
        %v339 = vld [vmem:[%s310 + $0x6] sm:$0x1]
        %v340 = vld [vmem:[%s310 + $0x7] sm:$0x1]
        %v341 = vld [vmem:[%s310 + $0x8] sm:$0x1]
        %v342 = vld [vmem:[%s257] sm:$0xf]
        %v343 = vld [vmem:[%s257 + $0x10] sm:$0xf]
        %v344 = vld [vmem:[%s257 + $0x20] sm:$0xf]
        %v345 = vld [vmem:[%s257 + $0x30] sm:$0xf]
        %v346 = vld [vmem:[%s257 + $0x40] sm:$0xf]
        %v347 = vld [vmem:[%s257 + $0x50] sm:$0xf]
        %v348 = vld [vmem:[%s257 + $0x60] sm:$0xf]
        %v349 = vld [vmem:[%s257 + $0x70] sm:$0xf]
        %v350 = vld [vmem:[%s257 + $0x80] sm:$0xf]
        %v351 = vld [vmem:[%s257 + $0x90] sm:$0xf]
        %v352 = vld [vmem:[%s257 + $0xa0] sm:$0xf]
        %v353 = vld [vmem:[%s257 + $0xb0] sm:$0xf]
        %v354 = vld [vmem:[%s257 + $0xc0] sm:$0xf]
        %v355 = vld [vmem:[%s257 + $0xd0] sm:$0xf]
        %v356 = vld [vmem:[%s257 + $0xe0] sm:$0xf]
        %v357 = vld [vmem:[%s257 + $0xf0] sm:$0xf]
        %v358 = vld [vmem:[%s257 + $0x4] sm:$0xf]
        %v359 = vld [vmem:[%s257 + $0x14] sm:$0xf]
        %v360 = vld [vmem:[%s257 + $0x24] sm:$0xf]
        %v361 = vld [vmem:[%s257 + $0x34] sm:$0xf]
        %v362 = vld [vmem:[%s257 + $0x44] sm:$0xf]
        %v363 = vld [vmem:[%s257 + $0x54] sm:$0xf]
        %v364 = vld [vmem:[%s257 + $0x64] sm:$0xf]
        %v365 = vld [vmem:[%s257 + $0x74] sm:$0xf]
        %v366 = vld [vmem:[%s257 + $0x84] sm:$0xf]
        %v367 = vld [vmem:[%s257 + $0x94] sm:$0xf]
        %v368 = vld [vmem:[%s257 + $0xa4] sm:$0xf]
        %v369 = vld [vmem:[%s257 + $0xb4] sm:$0xf]
        %v370 = vld [vmem:[%s257 + $0xc4] sm:$0xf]
        %v371 = vld [vmem:[%s257 + $0xd4] sm:$0xf]
        %v372 = vld [vmem:[%s257 + $0xe4] sm:$0xf]
        %v373 = vld [vmem:[%s257 + $0xf4] sm:$0xf]
        %v374 = vld [vmem:[%s257 + $0x8] sm:$0xf]
        %v375 = vld [vmem:[%s257 + $0x18] sm:$0xf]
        %v376 = vld [vmem:[%s257 + $0x28] sm:$0xf]
        %v377 = vld [vmem:[%s257 + $0x38] sm:$0xf]
        %v378 = vld [vmem:[%s257 + $0x48] sm:$0xf]
        %v379 = vld [vmem:[%s257 + $0x58] sm:$0xf]
        %v380 = vld [vmem:[%s257 + $0x68] sm:$0xf]
        %v381 = vld [vmem:[%s257 + $0x78] sm:$0xf]
        %v382 = vld [vmem:[%s257 + $0x88] sm:$0xf]
        %v383 = vld [vmem:[%s257 + $0x98] sm:$0xf]
        %v384 = vld [vmem:[%s257 + $0xa8] sm:$0xf]
        %v385 = vld [vmem:[%s257 + $0xb8] sm:$0xf]
        %v386 = vld [vmem:[%s257 + $0xc8] sm:$0xf]
        %v387 = vld [vmem:[%s257 + $0xd8] sm:$0xf]
        %v388 = vld [vmem:[%s257 + $0xe8] sm:$0xf]
        %v389 = vld [vmem:[%s257 + $0xf8] sm:$0xf]
        %v390 = vld [vmem:[%s257 + $0xc] sm:$0xf]
        %v391 = vld [vmem:[%s257 + $0x1c] sm:$0xf]
        %v392 = vld [vmem:[%s257 + $0x2c] sm:$0xf]
        %v393 = vld [vmem:[%s257 + $0x3c] sm:$0xf]
        %v394 = vld [vmem:[%s257 + $0x4c] sm:$0xf]
        %v395 = vld [vmem:[%s257 + $0x5c] sm:$0xf]
        %v396 = vld [vmem:[%s257 + $0x6c] sm:$0xf]
        %v397 = vld [vmem:[%s257 + $0x7c] sm:$0xf]
        %v398 = vld [vmem:[%s257 + $0x8c] sm:$0xf]
        %v399 = vld [vmem:[%s257 + $0x9c] sm:$0xf]
        %v400 = vld [vmem:[%s257 + $0xac] sm:$0xf]
        %v401 = vld [vmem:[%s257 + $0xbc] sm:$0xf]
        %v402 = vld [vmem:[%s257 + $0xcc] sm:$0xf]
        %v403 = vld [vmem:[%s257 + $0xdc] sm:$0xf]
        %v404 = vld [vmem:[%s257 + $0xec] sm:$0xf]
        %v405 = vld [vmem:[%s257 + $0xfc] sm:$0xf]
        %406 = vadd.xlane.f32.xlu0 %v331
        %v407 = vpop.xlane.xlu0 %406
        %408 = vadd.xlane.f32.xlu0 %v332
        %v409 = vpop.xlane.xlu0 %408
        %v410 = vmul.f32 %v407, 0.03125
        %v411 = vmul.f32 %v409, 0.03125
        %v412 = vmul.f32 %v331, %v331
        %v413 = vmul.f32 %v332, %v332
        %414 = vadd.xlane.f32.xlu0 %v412
        %v415 = vpop.xlane.xlu0 %414
        %416 = vadd.xlane.f32.xlu0 %v413
        %v417 = vpop.xlane.xlu0 %416
        %v418 = vmul.f32 %v415, 0.03125
        %v419 = vmul.f32 %v417, 0.03125
        %v420 = vmul.f32 %v410, %v410
        %v421 = vmul.f32 %v411, %v411
        %v422 = vsub.f32 %v418, %v420
        %v423 = vsub.f32 %v419, %v421
        %v424 = vsub.f32 %v331, %v410
        %v425 = vsub.f32 %v332, %v411
        %v426 = vadd.f32 %v422, 1e-05
        %v427 = vadd.f32 %v423, 1e-05
        %v428 = vrsqrt.pop %v426
        %v429 = vmul.f32 %v428, %v426
        %v430 = vmul.f32 %v429, %v428
        %v431 = vmul.f32 0.5, %v430
        %v432 = vsub.f32 1.5, %v431
        %v433 = vmul.f32 %v428, %v432
        %vm434 = vweird.f32 %v426
        %vm435 = vweird.f32 %v428
        %vm436 = vmor %vm434, %vm435
        %v437 = vsel %vm436, %v428, %v433
        %v438 = vrsqrt.pop %v427
        %v439 = vmul.f32 %v438, %v427
        %v440 = vmul.f32 %v439, %v438
        %v441 = vmul.f32 0.5, %v440
        %v442 = vsub.f32 1.5, %v441
        %v443 = vmul.f32 %v438, %v442
        %vm444 = vweird.f32 %v427
        %vm445 = vweird.f32 %v438
        %vm446 = vmor %vm444, %vm445
        %v447 = vsel %vm446, %v438, %v443
        %v448 = vmul.f32 %v424, %v437
        %v449 = vmul.f32 %v425, %v447
        %v450 = vperm.slane %v333, 0
        %v451 = vmul.f32 %v448, %v450
        %v452 = vmul.f32 %v449, %v450
        %v453 = vperm.slane %v334, 0
        %v454 = vadd.f32 %v451, %v453
        %v455 = vadd.f32 %v452, %v453
        %v456 = vpack.c.bf16 %v455, %v454
        %v457 = vperm.slane %v335, 0
        %v474 = vunpack.c.l.b16 %v342
        %v475 = vunpack.c.l.b16 %v343
        %v476 = vunpack.c.l.b16 %v344
        %v477 = vunpack.c.l.b16 %v345
        %v478 = vunpack.c.l.b16 %v346
        %v479 = vunpack.c.l.b16 %v347
        %v480 = vunpack.c.l.b16 %v348
        %v481 = vunpack.c.l.b16 %v349
        %v482 = vunpack.c.l.b16 %v350
        %v483 = vunpack.c.l.b16 %v351
        %v484 = vunpack.c.l.b16 %v352
        %v485 = vunpack.c.l.b16 %v353
        %v486 = vunpack.c.l.b16 %v354
        %v487 = vunpack.c.l.b16 %v355
        %v488 = vunpack.c.l.b16 %v356
        %v489 = vunpack.c.l.b16 %v357
        %v490 = vpack.c.b16 %v475, %v474
        %v491 = vpack.c.b16 %v477, %v476
        %v492 = vpack.c.b16 %v479, %v478
        %v493 = vpack.c.b16 %v481, %v480
        %v494 = vpack.c.b16 %v483, %v482
        %v495 = vpack.c.b16 %v485, %v484
        %v496 = vpack.c.b16 %v487, %v486
        %v497 = vpack.c.b16 %v489, %v488
        %506 = vmatpush.bf16.msra.mxu0 %v497
        %507 = vmatpush.bf16.msra.mxu0 %v496
        %508 = vmatpush.bf16.msra.mxu0 %v495
        %509 = vmatpush.bf16.msra.mxu0 %v494
        %510 = vmatpush.bf16.msra.mxu0 %v493
        %511 = vmatpush.bf16.msra.mxu0 %v492
        %512 = vmatpush.bf16.msra.mxu0 %v491
        %513 = vmatpush.bf16.msra.mxu0 %v490
        %514 = vmatmul.bf16.gmra.mxu0 %v456
        %v515 = vpop.f32.mrf.mxu0
        %v516 = vadd.f32 %v457, %v515
        %v517 = vpop.f32.mrf.mxu0
        %v518 = vadd.f32 %v457, %v517
        %519 = vdwg.mxu0
        %v520 = vperm.slane %v336, 0
        %v537 = vunpack.c.l.b16 %v358
        %v538 = vunpack.c.l.b16 %v359
        %v539 = vunpack.c.l.b16 %v360
        %v540 = vunpack.c.l.b16 %v361
        %v541 = vunpack.c.l.b16 %v362
        %v542 = vunpack.c.l.b16 %v363
        %v543 = vunpack.c.l.b16 %v364
        %v544 = vunpack.c.l.b16 %v365
        %v545 = vunpack.c.l.b16 %v366
        %v546 = vunpack.c.l.b16 %v367
        %v547 = vunpack.c.l.b16 %v368
        %v548 = vunpack.c.l.b16 %v369
        %v549 = vunpack.c.l.b16 %v370
        %v550 = vunpack.c.l.b16 %v371
        %v551 = vunpack.c.l.b16 %v372
        %v552 = vunpack.c.l.b16 %v373
        %v553 = vpack.c.b16 %v538, %v537
        %v554 = vpack.c.b16 %v540, %v539
        %v555 = vpack.c.b16 %v542, %v541
        %v556 = vpack.c.b16 %v544, %v543
        %v557 = vpack.c.b16 %v546, %v545
        %v558 = vpack.c.b16 %v548, %v547
        %v559 = vpack.c.b16 %v550, %v549
        %v560 = vpack.c.b16 %v552, %v551
        %569 = vmatpush.bf16.msra.mxu0 %v560
        %570 = vmatpush.bf16.msra.mxu0 %v559
        %571 = vmatpush.bf16.msra.mxu0 %v558
        %572 = vmatpush.bf16.msra.mxu0 %v557
        %573 = vmatpush.bf16.msra.mxu0 %v556
        %574 = vmatpush.bf16.msra.mxu0 %v555
        %575 = vmatpush.bf16.msra.mxu0 %v554
        %576 = vmatpush.bf16.msra.mxu0 %v553
        %577 = vmatmul.bf16.gmra.mxu0 %v456
        %v578 = vpop.f32.mrf.mxu0
        %v579 = vadd.f32 %v520, %v578
        %v580 = vpop.f32.mrf.mxu0
        %v581 = vadd.f32 %v520, %v580
        %582 = vdwg.mxu0
        %v583 = vperm.slane %v337, 0
        %v600 = vunpack.c.l.b16 %v374
        %v601 = vunpack.c.l.b16 %v375
        %v602 = vunpack.c.l.b16 %v376
        %v603 = vunpack.c.l.b16 %v377
        %v604 = vunpack.c.l.b16 %v378
        %v605 = vunpack.c.l.b16 %v379
        %v606 = vunpack.c.l.b16 %v380
        %v607 = vunpack.c.l.b16 %v381
        %v608 = vunpack.c.l.b16 %v382
        %v609 = vunpack.c.l.b16 %v383
        %v610 = vunpack.c.l.b16 %v384
        %v611 = vunpack.c.l.b16 %v385
        %v612 = vunpack.c.l.b16 %v386
        %v613 = vunpack.c.l.b16 %v387
        %v614 = vunpack.c.l.b16 %v388
        %v615 = vunpack.c.l.b16 %v389
        %v616 = vpack.c.b16 %v601, %v600
        %v617 = vpack.c.b16 %v603, %v602
        %v618 = vpack.c.b16 %v605, %v604
        %v619 = vpack.c.b16 %v607, %v606
        %v620 = vpack.c.b16 %v609, %v608
        %v621 = vpack.c.b16 %v611, %v610
        %v622 = vpack.c.b16 %v613, %v612
        %v623 = vpack.c.b16 %v615, %v614
        %632 = vmatpush.bf16.msra.mxu0 %v623
        %633 = vmatpush.bf16.msra.mxu0 %v622
        %634 = vmatpush.bf16.msra.mxu0 %v621
        %635 = vmatpush.bf16.msra.mxu0 %v620
        %636 = vmatpush.bf16.msra.mxu0 %v619
        %637 = vmatpush.bf16.msra.mxu0 %v618
        %638 = vmatpush.bf16.msra.mxu0 %v617
        %639 = vmatpush.bf16.msra.mxu0 %v616
        %640 = vmatmul.bf16.gmra.mxu0 %v456
        %v641 = vpop.f32.mrf.mxu0
        %v642 = vadd.f32 %v583, %v641
        %v643 = vpop.f32.mrf.mxu0
        %v644 = vadd.f32 %v583, %v643
        %645 = vdwg.mxu0
        %v646 = vpack.c.bf16 %v516, %v516
        %v647 = vpack.c.bf16 %v518, %v518
        %v648 = vpack.c.bf16 %v579, %v579
        %v649 = vpack.c.bf16 %v581, %v581
        %v650 = vpack.c.bf16 %v642, %v642
        %v651 = vpack.c.bf16 %v644, %v644
        %652 = vmatpush.bf16.xpose.msra.mxu0 0
        %653 = vmatpush.bf16.xpose.msra.mxu0 0
        %654 = vmatpush.bf16.xpose.msra.mxu0 0
        %655 = vmatpush.bf16.xpose.msra.mxu0 0
        %656 = vmatpush.bf16.xpose.msra.mxu0 0
        %657 = vmatpush.bf16.xpose.msra.mxu0 0
        %658 = vmatpush.bf16.xpose.msra.mxu0 0
        %659 = vmatpush.bf16.xpose.msra.mxu0 %v648
        %660 = vmatmul.bf16.gmra.mxu0 %v646
        %v661 = vpop.f32.mrf.mxu0
        %v662 = vadd.f32 0.0, %v661
        %v663 = vpop.f32.mrf.mxu0
        %664 = vdwg.mxu0
        %665 = vmatpush.bf16.xpose.msra.mxu0 0
        %666 = vmatpush.bf16.xpose.msra.mxu0 0
        %667 = vmatpush.bf16.xpose.msra.mxu0 0
        %668 = vmatpush.bf16.xpose.msra.mxu0 0
        %669 = vmatpush.bf16.xpose.msra.mxu0 0
        %670 = vmatpush.bf16.xpose.msra.mxu0 0
        %671 = vmatpush.bf16.xpose.msra.mxu0 0
        %672 = vmatpush.bf16.xpose.msra.mxu0 %v649
        %673 = vmatmul.bf16.gmra.mxu0 %v647
        %v674 = vpop.f32.mrf.mxu0
        %v675 = vadd.f32 0.0, %v674
        %v676 = vpop.f32.mrf.mxu0
        %677 = vdwg.mxu0
        %v678 = vlaneseq
        %v679 = vshrl.u32 %v678, 7
        %v680 = vlaneseq
        %v681 = vand.u32 %v680, 127
        %vm682 = vcmp.le.s32.totalorder %v681, %v679
        %v683 = vsel %vm682, 1, 0
        %vm684 = vcmp.eq.s32.totalorder %v683, 1
        %v685 = vsel %vm684, %v662, -1e+30
        %v686 = vsel %vm684, %v675, -1e+30
        %vm687 = vcmask 64512
        %v688 = vsel %vm687, %v685, -inf
        %689 = vmax.xlane.f32.xlu0 %v688
        %v690 = vpop.xlane.xlu0 %689
        %v691 = vsel %vm687, %v686, -inf
        %692 = vmax.xlane.f32.xlu0 %v691
        %v693 = vpop.xlane.xlu0 %692
        %v694 = vsub.f32 %v685, %v690
        %v695 = vsub.f32 %v686, %v693
        %v696 = vmul.f32 %v694, 1.442695
        %v697 = vpow.pop %v696
        %v698 = vmul.f32 %v695, 1.442695
        %v699 = vpow.pop %v698
        %v700 = vsel %vm687, %v697, 0.0
        %701 = vadd.xlane.f32.xlu0 %v700
        %v702 = vpop.xlane.xlu0 %701
        %v703 = vsel %vm687, %v699, 0.0
        %704 = vadd.xlane.f32.xlu0 %v703
        %v705 = vpop.xlane.xlu0 %704
        %v706 = vrcp.pop %v702
        %v707 = vrcp.pop %v705
        %v708 = vmul.f32 %v697, %v706
        %v709 = vmul.f32 %v699, %v707
        %v710 = vpack.c.bf16 %v708, %v708
        %v711 = vpack.c.bf16 %v709, %v709
        %v713 = vsel %vm687, %v710, 0
        %vm715 = vcmask 1043456
        %v717 = vsel %vm715, %v650, 0
        %719 = vmatpush.bf16.msra.mxu0 0
        %720 = vmatpush.bf16.msra.mxu0 0
        %721 = vmatpush.bf16.msra.mxu0 0
        %722 = vmatpush.bf16.msra.mxu0 0
        %723 = vmatpush.bf16.msra.mxu0 0
        %724 = vmatpush.bf16.msra.mxu0 0
        %725 = vmatpush.bf16.msra.mxu0 0
        %726 = vmatpush.bf16.msra.mxu0 %v717
        %727 = vmatmul.bf16.gmra.mxu0 %v713
        %v728 = vpop.f32.mrf.mxu0
        %v729 = vadd.f32 0.0, %v728
        %v730 = vpop.f32.mrf.mxu0
        %731 = vdwg.mxu0
        %v733 = vsel %vm687, %v711, 0
        %v736 = vsel %vm715, %v651, 0
        %738 = vmatpush.bf16.msra.mxu0 0
        %739 = vmatpush.bf16.msra.mxu0 0
        %740 = vmatpush.bf16.msra.mxu0 0
        %741 = vmatpush.bf16.msra.mxu0 0
        %742 = vmatpush.bf16.msra.mxu0 0
        %743 = vmatpush.bf16.msra.mxu0 0
        %744 = vmatpush.bf16.msra.mxu0 0
        %745 = vmatpush.bf16.msra.mxu0 %v736
        %746 = vmatmul.bf16.gmra.mxu0 %v733
        %v747 = vpop.f32.mrf.mxu0
        %v748 = vadd.f32 0.0, %v747
        %v749 = vpop.f32.mrf.mxu0
        %750 = vdwg.mxu0
        %v751 = vadd.f32 %v331, %v729
        %v752 = vadd.f32 %v332, %v748
        %753 = vadd.xlane.f32.xlu0 %v751
        %v754 = vpop.xlane.xlu0 %753
        %755 = vadd.xlane.f32.xlu0 %v752
        %v756 = vpop.xlane.xlu0 %755
        %v757 = vmul.f32 %v754, 0.03125
        %v758 = vmul.f32 %v756, 0.03125
        %v759 = vmul.f32 %v751, %v751
        %v760 = vmul.f32 %v752, %v752
        %761 = vadd.xlane.f32.xlu0 %v759
        %v762 = vpop.xlane.xlu0 %761
        %763 = vadd.xlane.f32.xlu0 %v760
        %v764 = vpop.xlane.xlu0 %763
        %v765 = vmul.f32 %v762, 0.03125
        %v766 = vmul.f32 %v764, 0.03125
        %v767 = vmul.f32 %v757, %v757
        %v768 = vmul.f32 %v758, %v758
        %v769 = vsub.f32 %v765, %v767
        %v770 = vsub.f32 %v766, %v768
        %v771 = vsub.f32 %v751, %v757
        %v772 = vsub.f32 %v752, %v758
        %v773 = vadd.f32 %v769, 1e-05
        %v774 = vadd.f32 %v770, 1e-05
        %v775 = vrsqrt.pop %v773
        %v776 = vmul.f32 %v775, %v773
        %v777 = vmul.f32 %v776, %v775
        %v778 = vmul.f32 0.5, %v777
        %v779 = vsub.f32 1.5, %v778
        %v780 = vmul.f32 %v775, %v779
        %vm781 = vweird.f32 %v773
        %vm782 = vweird.f32 %v775
        %vm783 = vmor %vm781, %vm782
        %v784 = vsel %vm783, %v775, %v780
        %v785 = vrsqrt.pop %v774
        %v786 = vmul.f32 %v785, %v774
        %v787 = vmul.f32 %v786, %v785
        %v788 = vmul.f32 0.5, %v787
        %v789 = vsub.f32 1.5, %v788
        %v790 = vmul.f32 %v785, %v789
        %vm791 = vweird.f32 %v774
        %vm792 = vweird.f32 %v785
        %vm793 = vmor %vm791, %vm792
        %v794 = vsel %vm793, %v785, %v790
        %v795 = vmul.f32 %v771, %v784
        %v796 = vmul.f32 %v772, %v794
        %v797 = vperm.slane %v338, 0
        %v798 = vmul.f32 %v795, %v797
        %v799 = vmul.f32 %v796, %v797
        %v800 = vperm.slane %v339, 0
        %v801 = vadd.f32 %v798, %v800
        %v802 = vadd.f32 %v799, %v800
        %v803 = vpack.c.bf16 %v802, %v801
        %v804 = vperm.slane %v340, 0
        %v821 = vunpack.c.l.b16 %v390
        %v822 = vunpack.c.l.b16 %v391
        %v823 = vunpack.c.l.b16 %v392
        %v824 = vunpack.c.l.b16 %v393
        %v825 = vunpack.c.l.b16 %v394
        %v826 = vunpack.c.l.b16 %v395
        %v827 = vunpack.c.l.b16 %v396
        %v828 = vunpack.c.l.b16 %v397
        %v829 = vunpack.c.l.b16 %v398
        %v830 = vunpack.c.l.b16 %v399
        %v831 = vunpack.c.l.b16 %v400
        %v832 = vunpack.c.l.b16 %v401
        %v833 = vunpack.c.l.b16 %v402
        %v834 = vunpack.c.l.b16 %v403
        %v835 = vunpack.c.l.b16 %v404
        %v836 = vunpack.c.l.b16 %v405
        %v837 = vpack.c.b16 %v822, %v821
        %v838 = vpack.c.b16 %v824, %v823
        %v839 = vpack.c.b16 %v826, %v825
        %v840 = vpack.c.b16 %v828, %v827
        %v841 = vpack.c.b16 %v830, %v829
        %v842 = vpack.c.b16 %v832, %v831
        %v843 = vpack.c.b16 %v834, %v833
        %v844 = vpack.c.b16 %v836, %v835
        %853 = vmatpush.bf16.msra.mxu0 %v844
        %854 = vmatpush.bf16.msra.mxu0 %v843
        %855 = vmatpush.bf16.msra.mxu0 %v842
        %856 = vmatpush.bf16.msra.mxu0 %v841
        %857 = vmatpush.bf16.msra.mxu0 %v840
        %858 = vmatpush.bf16.msra.mxu0 %v839
        %859 = vmatpush.bf16.msra.mxu0 %v838
        %860 = vmatpush.bf16.msra.mxu0 %v837
        %861 = vmatmul.bf16.gmra.mxu0 %v803
        %v862 = vpop.f32.mrf.mxu0
        %v863 = vadd.f32 %v804, %v862
        %v864 = vpop.f32.mrf.mxu0
        %v865 = vadd.f32 %v804, %v864
        %866 = vdwg.mxu0
        %v867 = vmul.f32 %v863, 0.5
        %v868 = vmul.f32 %v865, 0.5
        %v869 = vmul.f32 %v863, 0.70710677
        %v870 = vmul.f32 %v865, 0.70710677
        %v871 = vmul.f32 %v869, %v869
        %v872 = vmin.f32 16.0, %v871
        %v873 = vmul.f32 %v872, 2.1237322e-06
        %v874 = vadd.f32 %v873, 0.00028619796
        %v875 = vmul.f32 %v872, %v874
        %v876 = vadd.f32 %v875, 0.0036580483
        %v877 = vmul.f32 %v872, %v876
        %v878 = vadd.f32 %v877, 0.05243302
        %v879 = vmul.f32 %v872, %v878
        %v880 = vadd.f32 %v879, 0.18741608
        %v881 = vmul.f32 %v872, %v880
        %v882 = vadd.f32 %v881, 1.1283791
        %v883 = vmul.f32 %v869, %v882
        %v884 = vmul.f32 %v872, 3.8918573e-05
        %v885 = vadd.f32 %v884, 0.001143296
        %v886 = vmul.f32 %v872, %v885
        %v887 = vadd.f32 %v886, 0.014752088
        %v888 = vmul.f32 %v872, %v887
        %v889 = vadd.f32 %v888, 0.112945676
        %v890 = vmul.f32 %v872, %v889
        %v891 = vadd.f32 %v890, 0.4994258
        %v892 = vmul.f32 %v872, %v891
        %v893 = vadd.f32 %v892, 1.0
        %v894 = vrcp.pop %v893
        %v895 = vmul.f32 %v893, %v894
        %v896 = vsub.f32 1.0, %v895
        %v897 = vmul.f32 %v894, %v896
        %v898 = vadd.f32 %v894, %v897
        %vm899 = vweird.f32 %v893
        %vm900 = vweird.f32 %v894
        %vm901 = vmor %vm899, %vm900
        %v902 = vsel %vm901, %v894, %v898
        %v903 = vand.u32 2147483647, %v893
        %vm904 = vcmp.eq.f32.partialorder %v903, 8.507059e+37
        %v905 = vand.u32 %v893, 2147483648
        %v906 = vor.u32 1.1754944e-38, %v905
        %v907 = vsel %vm904, %v906, %v902
        %v908 = vmul.f32 %v883, %v907
        %v909 = vmin.f32 %v908, 1.0
        %v910 = vmax.f32 %v909, -1.0
        %v911 = vmul.f32 %v870, %v870
        %v912 = vmin.f32 16.0, %v911
        %v913 = vmul.f32 %v912, 2.1237322e-06
        %v914 = vadd.f32 %v913, 0.00028619796
        %v915 = vmul.f32 %v912, %v914
        %v916 = vadd.f32 %v915, 0.0036580483
        %v917 = vmul.f32 %v912, %v916
        %v918 = vadd.f32 %v917, 0.05243302
        %v919 = vmul.f32 %v912, %v918
        %v920 = vadd.f32 %v919, 0.18741608
        %v921 = vmul.f32 %v912, %v920
        %v922 = vadd.f32 %v921, 1.1283791
        %v923 = vmul.f32 %v870, %v922
        %v924 = vmul.f32 %v912, 3.8918573e-05
        %v925 = vadd.f32 %v924, 0.001143296
        %v926 = vmul.f32 %v912, %v925
        %v927 = vadd.f32 %v926, 0.014752088
        %v928 = vmul.f32 %v912, %v927
        %v929 = vadd.f32 %v928, 0.112945676
        %v930 = vmul.f32 %v912, %v929
        %v931 = vadd.f32 %v930, 0.4994258
        %v932 = vmul.f32 %v912, %v931
        %v933 = vadd.f32 %v932, 1.0
        %v934 = vrcp.pop %v933
        %v935 = vmul.f32 %v933, %v934
        %v936 = vsub.f32 1.0, %v935
        %v937 = vmul.f32 %v934, %v936
        %v938 = vadd.f32 %v934, %v937
        %vm939 = vweird.f32 %v933
        %vm940 = vweird.f32 %v934
        %vm941 = vmor %vm939, %vm940
        %v942 = vsel %vm941, %v934, %v938
        %v943 = vand.u32 2147483647, %v933
        %vm944 = vcmp.eq.f32.partialorder %v943, 8.507059e+37
        %v945 = vand.u32 %v933, 2147483648
        %v946 = vor.u32 1.1754944e-38, %v945
        %v947 = vsel %vm944, %v946, %v942
        %v948 = vmul.f32 %v923, %v947
        %v949 = vmin.f32 %v948, 1.0
        %v950 = vmax.f32 %v949, -1.0
        %v951 = vadd.f32 %v910, 1.0
        %v952 = vadd.f32 %v950, 1.0
        %v953 = vmul.f32 %v867, %v951
        %v954 = vmul.f32 %v868, %v952
        %v955 = vpack.c.bf16 %v954, %v953
        %v956 = vld [vmem:[%s315] sm:$0xf]
        %v957 = vld [vmem:[%s315 + $0x4] sm:$0xf]
        %v958 = vld [vmem:[%s315 + $0x8] sm:$0xf]
        %v959 = vld [vmem:[%s315 + $0xc] sm:$0xf]
        %v960 = vld [vmem:[%s315 + $0x10] sm:$0xf]
        %v961 = vld [vmem:[%s315 + $0x14] sm:$0xf]
        %v962 = vld [vmem:[%s315 + $0x18] sm:$0xf]
        %v963 = vld [vmem:[%s315 + $0x1c] sm:$0xf]
        %v964 = vld [vmem:[%s315 + $0x20] sm:$0xf]
        %v965 = vld [vmem:[%s315 + $0x24] sm:$0xf]
        %v966 = vld [vmem:[%s315 + $0x28] sm:$0xf]
        %v967 = vld [vmem:[%s315 + $0x2c] sm:$0xf]
        %v968 = vld [vmem:[%s315 + $0x30] sm:$0xf]
        %v969 = vld [vmem:[%s315 + $0x34] sm:$0xf]
        %v970 = vld [vmem:[%s315 + $0x38] sm:$0xf]
        %v971 = vld [vmem:[%s315 + $0x3c] sm:$0xf]
        %v972 = vperm.slane %v341, 0
        %v989 = vunpack.c.l.b16 %v956
        %v990 = vunpack.c.l.b16 %v957
        %v991 = vunpack.c.l.b16 %v958
        %v992 = vunpack.c.l.b16 %v959
        %v993 = vunpack.c.l.b16 %v960
        %v994 = vunpack.c.l.b16 %v961
        %v995 = vunpack.c.l.b16 %v962
        %v996 = vunpack.c.l.b16 %v963
        %v997 = vunpack.c.l.b16 %v964
        %v998 = vunpack.c.l.b16 %v965
        %v999 = vunpack.c.l.b16 %v966
        %v1000 = vunpack.c.l.b16 %v967
        %v1001 = vunpack.c.l.b16 %v968
        %v1002 = vunpack.c.l.b16 %v969
        %v1003 = vunpack.c.l.b16 %v970
        %v1004 = vunpack.c.l.b16 %v971
        %v1005 = vpack.c.b16 %v990, %v989
        %v1006 = vpack.c.b16 %v992, %v991
        %v1007 = vpack.c.b16 %v994, %v993
        %v1008 = vpack.c.b16 %v996, %v995
        %v1009 = vpack.c.b16 %v998, %v997
        %v1010 = vpack.c.b16 %v1000, %v999
        %v1011 = vpack.c.b16 %v1002, %v1001
        %v1012 = vpack.c.b16 %v1004, %v1003
        %1021 = vmatpush.bf16.msra.mxu0 %v1012
        %1022 = vmatpush.bf16.msra.mxu0 %v1011
        %1023 = vmatpush.bf16.msra.mxu0 %v1010
        %1024 = vmatpush.bf16.msra.mxu0 %v1009
        %1025 = vmatpush.bf16.msra.mxu0 %v1008
        %1026 = vmatpush.bf16.msra.mxu0 %v1007
        %1027 = vmatpush.bf16.msra.mxu0 %v1006
        %1028 = vmatpush.bf16.msra.mxu0 %v1005
        %1029 = vmatmul.bf16.gmra.mxu0 %v955
        %v1030 = vpop.f32.mrf.mxu0
        %v1031 = vadd.f32 %v972, %v1030
        %v1032 = vpop.f32.mrf.mxu0
        %v1033 = vadd.f32 %v972, %v1032
        %1034 = vdwg.mxu0
        %v1035 = vadd.f32 %v751, %v1031
        %v1036 = vadd.f32 %v752, %v1033
        %p1037 = scmp.lt.s32.totalorder %s24, 1
        // Predicated region
        $region49: #{gpt_forward.2} parent=39 // pred_check
          %p1038 = pneg %p1037
        $region50: #{gpt_forward.2} parent=39 // pred_check_branch
          %1040 = sbr.rel (%p1038) target = $region52
        $region51: #{gpt_forward.2} parent=39 // pred_region
          %1041 = vst [vmem:[%s320] sm:$0xff] %v1035
          %1042 = vst [vmem:[%s320 + $0x8] sm:$0xff] %v1036
        $region52: #{gpt_forward.2} parent=39 // pred_fallthru
          _
        %p1043 = scmp.eq.s32.totalorder %s24, 1
        // Predicated region
        $region53: #{gpt_forward.2} parent=39 // pred_check
          %p1044 = pneg %p1043
        $region54: #{gpt_forward.2} parent=39 // pred_check_branch
          %1046 = sbr.rel (%p1044) target = $region56
        $region55: #{gpt_forward.2} parent=39 // pred_region
          %v1047 = vld [vmem:[%s4] sm:$0x1]
          %v1048 = vld [vmem:[%s4 + $0x1] sm:$0x1]
          %1049 = vadd.xlane.f32.xlu0 %v1035
          %v1050 = vpop.xlane.xlu0 %1049
          %1051 = vadd.xlane.f32.xlu0 %v1036
          %v1052 = vpop.xlane.xlu0 %1051
          %v1053 = vmul.f32 %v1050, 0.03125
          %v1054 = vmul.f32 %v1052, 0.03125
          %v1055 = vmul.f32 %v1035, %v1035
          %v1056 = vmul.f32 %v1036, %v1036
          %1057 = vadd.xlane.f32.xlu0 %v1055
          %v1058 = vpop.xlane.xlu0 %1057
          %1059 = vadd.xlane.f32.xlu0 %v1056
          %v1060 = vpop.xlane.xlu0 %1059
          %v1061 = vmul.f32 %v1058, 0.03125
          %v1062 = vmul.f32 %v1060, 0.03125
          %v1063 = vmul.f32 %v1053, %v1053
          %v1064 = vmul.f32 %v1054, %v1054
          %v1065 = vsub.f32 %v1061, %v1063
          %v1066 = vsub.f32 %v1062, %v1064
          %v1067 = vsub.f32 %v1035, %v1053
          %v1068 = vsub.f32 %v1036, %v1054
          %v1069 = vadd.f32 %v1065, 1e-05
          %v1070 = vadd.f32 %v1066, 1e-05
          %v1071 = vrsqrt.pop %v1069
          %v1072 = vmul.f32 %v1071, %v1069
          %v1073 = vmul.f32 %v1072, %v1071
          %v1074 = vmul.f32 0.5, %v1073
          %v1075 = vsub.f32 1.5, %v1074
          %v1076 = vmul.f32 %v1071, %v1075
          %vm1077 = vweird.f32 %v1069
          %vm1078 = vweird.f32 %v1071
          %vm1079 = vmor %vm1077, %vm1078
          %v1080 = vsel %vm1079, %v1071, %v1076
          %v1081 = vrsqrt.pop %v1070
          %v1082 = vmul.f32 %v1081, %v1070
          %v1083 = vmul.f32 %v1082, %v1081
          %v1084 = vmul.f32 0.5, %v1083
          %v1085 = vsub.f32 1.5, %v1084
          %v1086 = vmul.f32 %v1081, %v1085
          %vm1087 = vweird.f32 %v1070
          %vm1088 = vweird.f32 %v1081
          %vm1089 = vmor %vm1087, %vm1088
          %v1090 = vsel %vm1089, %v1081, %v1086
          %v1091 = vmul.f32 %v1067, %v1080
          %v1092 = vmul.f32 %v1068, %v1090
          %v1093 = vperm.slane %v1047, 0
          %v1094 = vmul.f32 %v1091, %v1093
          %v1095 = vmul.f32 %v1092, %v1093
          %v1096 = vperm.slane %v1048, 0
          %v1097 = vadd.f32 %v1094, %v1096
          %v1098 = vadd.f32 %v1095, %v1096
          %1099 = vst [vmem:[%s320] sm:$0xff] %v1097
          %1100 = vst [vmem:[%s320 + $0x8] sm:$0xff] %v1098
        $region56: #{gpt_forward.2} parent=39 // pred_fallthru
          _
        %s1101 = smul.u32 2, %s23
        %p1102 = scmp.lt.s32.totalorder %s1101, 1
        %s1103 = scalar_select %p1102, %s1101, 1
        %s1104 = smul.addr %s1103, 8
        %s1105 = scalar_lea.vmem %s5, %s1104
        // Predicated region
        $region57: #{gpt_forward.2} parent=39 // pred_check
          %p1106 = pneg %p174
        $region58: #{gpt_forward.2} parent=39 // pred_check_branch
          %1108 = sbr.rel (%p1106) target = $region60
        $region59: #{gpt_forward.2} parent=39 // pred_region
          %s1109 = smul.u32 2, %s23
        $region60: #{gpt_forward.2} parent=39 // pred_fallthru
          _
        // Predicated region
        $region61: #{gpt_forward.2} parent=39 // pred_check
          %p1110 = pneg %p174
        $region62: #{gpt_forward.2} parent=39 // pred_check_branch
          %1112 = sbr.rel (%p1110) target = $region64
        $region63: #{gpt_forward.2} parent=39 // pred_region
          %s1113 = smul.u32 2, %s23
          %p1114 = scmp.lt.s32.totalorder %s1113, 1
          %s1115 = scalar_select %p1114, %s1113, 1
          %s1116 = smul.addr %s1115, 8
          %s1117 = scalar_lea.vmem %s5, %s1116
        $region64: #{gpt_forward.2} parent=39 // pred_fallthru
          _
      $region40: #{gpt_forward.2} parent=5 // pred_fallthru
        _
      %p1118 = scmp.le.s32.totalorder 2, %s14
      // Predicated region
      $region65: #{gpt_forward.2} parent=5 // pred_check
        %p1119 = pneg %p1118
      $region66: #{gpt_forward.2} parent=5 // pred_check_branch
        %1121 = sbr.rel (%p1119) target = $region68
      $region67: #{gpt_forward.2} parent=5 // pred_region
        %s1122 = ssub.s32 %s14, 2
      $region68: #{gpt_forward.2} parent=5 // pred_fallthru
        _
    $region6: #{gpt_forward.2} parent=1 // loop_footer
      %s18 = sadd.s32 1, %s14
    $region7: #{gpt_forward.2} parent=1 // loop_footer_branch
      %13 = sbr.rel target = $region3
    $region8: #{gpt_forward.2} parent=1 // loop_exit
      _
    %1123 = vsyncpa [#allocation3], 1
    %s1124 = scalar_lea.sflag [#allocation3], 1
    %1125 = vsyncpa %s1124, 1

</llo_original>
